<compile_context>
chip_gen: v7x
topology: tpu7x:2x2x1
jax: 0.10.0
libtpu: 0.0.40
codegen_flags: <defaults>
</compile_context>

<pallas_src>
import math

import jax
import jax.numpy as jnp
from jax.experimental import pallas as pl
from jax.experimental.pallas import tpu as pltpu

D_MODEL = 4
INPUT_DIM = 5
NHEAD = 4
NUM_LAYERS = 1
OUTPUT_DIM = 1
D_FF = 2048          # nn.TransformerEncoderLayer default dim_feedforward
LN_EPS = 1e-5        # nn.LayerNorm default eps


def _layernorm(z, w, b):
    mu = jnp.mean(z, axis=-1, keepdims=True)
    var = jnp.mean((z - mu) ** 2, axis=-1, keepdims=True)   # biased variance (PyTorch)
    return (z - mu) * jax.lax.rsqrt(var + LN_EPS) * w + b


def _make_kernel(S, TB):
    assert D_MODEL % NHEAD == 0
    head_dim = D_MODEL // NHEAD
    # With d_model=4, nhead=4 the head dim is 1: per-(batch, head) logits for the
    # last query are plain VPU broadcasts, no per-head loop needed.
    assert head_dim == 1
    scale = 1.0 / math.sqrt(head_dim)

    def kernel(src_ref, pe_bias_ref, w_enc_ref,
               w_in_ref, b_in_ref,          # MHA in_proj:  (D, 3D), (1, 3D)
               w_out_ref, b_out_ref,        # MHA out_proj: (D, D), (1, D)
               w_ff1_ref, b_ff1_ref,        # FFN linear1:  (D, DFF) bf16, (1, DFF)
               w_ff2_ref, b_ff2_ref,        # FFN linear2:  (DFF, D) bf16, (1, D)
               ln1_w_ref, ln1_b_ref,        # (1, D)
               ln2_w_ref, ln2_b_ref,        # (1, D)
               w_dec_ref, b_dec_ref,        # decoder: (D, 1), (1, 1)
               out_ref):                    # (1, TB) lane-dense
        # ---- encoder Linear on all TB*S rows; PE + encoder bias pre-fused ----
        x2 = jnp.dot(src_ref[...], w_enc_ref[...],
                     preferred_element_type=jnp.float32) + pe_bias_ref[...]     # (TB*S, D)

        # ---- qkv in_proj for all rows (k/v need every position) ----
        qkv2 = jnp.dot(x2, w_in_ref[...],
                       preferred_element_type=jnp.float32) + b_in_ref[...]      # (TB*S, 3D)

        # Sublane-tile-aligned reshapes (S == 8) to per-batch views.
        x3 = x2.reshape(TB, S, D_MODEL)
        qkv3 = qkv2.reshape(TB, S, 3 * D_MODEL)

        x_last = x3[:, S - 1, :]                                # (TB, D)
        q_last = qkv3[:, S - 1, 0:D_MODEL] * scale              # (TB, D)
        k = qkv3[:, :, D_MODEL:2 * D_MODEL]                     # (TB, S, D) heads on lanes
        v = qkv3[:, :, 2 * D_MODEL:3 * D_MODEL]                 # (TB, S, D)

        # ---- attention for the last query position only, all heads at once ----
        logits = q_last[:, None, :] * k                         # (TB, S, D)
        m = jnp.max(logits, axis=1, keepdims=True)              # (TB, 1, D)
        p = jnp.exp(logits - m)                                 # (TB, S, D)
        denom = jnp.sum(p, axis=1)                              # (TB, D)
        ctx = jnp.sum(p * v, axis=1)                            # (TB, D)
        heads = ctx * pl.reciprocal(denom, approx=True)         # softmax normalize (EUP)
        attn = jnp.dot(heads, w_out_ref[...],
                       preferred_element_type=jnp.float32) + b_out_ref[...]     # (TB, D)

        # ---- residual + LayerNorm 1 (last position only) ----
        y = _layernorm(x_last + attn, ln1_w_ref[...], ln1_b_ref[...])           # (TB, D)

        # ---- FFN (last position only): bf16 operands, f32 accumulation ----
        hdn = jnp.dot(y.astype(jnp.bfloat16), w_ff1_ref[...],
                      preferred_element_type=jnp.float32) + b_ff1_ref[...]      # (TB, DFF)
        hdn = jnp.maximum(hdn, 0.0)
        f = jnp.dot(hdn.astype(jnp.bfloat16), w_ff2_ref[...],
                    preferred_element_type=jnp.float32) + b_ff2_ref[...]        # (TB, D)

        # ---- residual + LayerNorm 2 ----
        y2 = _layernorm(y + f, ln2_w_ref[...], ln2_b_ref[...])                  # (TB, D)

        # ---- decoder Linear(d_model -> 1), written lane-dense as (1, TB) ----
        out_ref[...] = (jnp.sum(y2.T * w_dec_ref[...], axis=0, keepdims=True)
                        + b_dec_ref[...])

    return kernel


def _round_up(x, m):
    return (x + m - 1) // m * m


def stock_transformer_forward(src, params, *, max_batch_tile=128):
    """src: (S, B, INPUT_DIM) float32 -> (B, OUTPUT_DIM) float32 (eval mode)."""
    S, B, _ = src.shape
    src_b = jnp.transpose(src, (1, 0, 2)).astype(jnp.float32)        # (B, S, IN)

    # Batch tile: pack up to 128 batch rows per grid step (sublane-friendly).
    TB = min(max_batch_tile, _round_up(B, 8))
    B_pad = _round_up(B, TB)
    num_tiles = B_pad // TB
    if B_pad != B:
        src_b = jnp.pad(src_b, ((0, B_pad - B), (0, 0), (0, 0)))
    src_flat = src_b.reshape(B_pad * S, INPUT_DIM)                   # (B_pad*S, IN)

    # Fuse positional encoding + encoder bias, tiled over the batch tile.
    pe_bias = (params["pe"][:S] + params["b_enc"][None, :]).astype(jnp.float32)
    pe_bias = jnp.tile(pe_bias, (TB, 1))                             # (TB*S, D)

    row = lambda v: v.reshape(1, -1).astype(jnp.float32)

    args = [
        src_flat, pe_bias,
        params["w_enc"].T.astype(jnp.float32),
        params["w_in"].T.astype(jnp.float32), row(params["b_in"]),
        params["w_out"].T.astype(jnp.float32), row(params["b_out"]),
        params["w_ff1"].T.astype(jnp.bfloat16), row(params["b_ff1"]),
        params["w_ff2"].T.astype(jnp.bfloat16), row(params["b_ff2"]),
        row(params["ln1_w"]), row(params["ln1_b"]),
        row(params["ln2_w"]), row(params["ln2_b"]),
        params["w_dec"].T.astype(jnp.float32),                       # (D, 1)
        row(params["b_dec"]),
    ]

    def full_spec(a):
        nd = a.ndim
        return pl.BlockSpec(a.shape, lambda i, _nd=nd: (0,) * _nd)

    in_specs = [pl.BlockSpec((TB * S, INPUT_DIM), lambda i: (i, 0))]
    in_specs += [full_spec(a) for a in args[1:]]
    out_spec = pl.BlockSpec((pl.Squeezed(), 1, TB), lambda i: (i, 0, 0))

    out = pl.pallas_call(
        _make_kernel(S, TB),
        grid=(num_tiles,),
        out_shape=jax.ShapeDtypeStruct((num_tiles, 1, TB), jnp.float32),
        in_specs=in_specs,
        out_specs=out_spec,
        compiler_params=pltpu.CompilerParams(
            dimension_semantics=("parallel",),          # batch tiles are independent
            vmem_limit_bytes=32 * 1024 * 1024),
    )(*args)
    return out.reshape(B_pad, OUTPUT_DIM)[:B]


# ------------------------- parameters / reference -------------------------

def positional_encoding(max_len, d_model):
    position = jnp.arange(max_len, dtype=jnp.float32)[:, None]
    div_term = jnp.exp(jnp.arange(0, d_model, 2, dtype=jnp.float32)
                       * (-math.log(10000.0) / d_model))
    ang = position * div_term                                   # (max_len, d_model//2)
    # interleave sin (even cols) and cos (odd cols)
    return jnp.stack([jnp.sin(ang), jnp.cos(ang)], axis=-1).reshape(max_len, d_model)


def init_params(key):
    ks = jax.random.split(key, 6)

    def linear(k, out_f, in_f):
        kw, kb = jax.random.split(k)
        bound = 1.0 / math.sqrt(in_f)
        w = jax.random.uniform(kw, (out_f, in_f), jnp.float32, -bound, bound)
        b = jax.random.uniform(kb, (out_f,), jnp.float32, -bound, bound)
        return w, b

    w_enc, b_enc = linear(ks[0], D_MODEL, INPUT_DIM)
    w_in, b_in = linear(ks[1], 3 * D_MODEL, D_MODEL)
    w_out, b_out = linear(ks[2], D_MODEL, D_MODEL)
    w_ff1, b_ff1 = linear(ks[3], D_FF, D_MODEL)
    w_ff2, b_ff2 = linear(ks[4], D_MODEL, D_FF)
    w_dec, b_dec = linear(ks[5], OUTPUT_DIM, D_MODEL)

    return dict(
        w_enc=w_enc, b_enc=b_enc,
        w_in=w_in, b_in=b_in, w_out=w_out, b_out=b_out,
        w_ff1=w_ff1, b_ff1=b_ff1, w_ff2=w_ff2, b_ff2=b_ff2,
        ln1_w=jnp.ones((D_MODEL,), jnp.float32), ln1_b=jnp.zeros((D_MODEL,), jnp.float32),
        ln2_w=jnp.ones((D_MODEL,), jnp.float32), ln2_b=jnp.zeros((D_MODEL,), jnp.float32),
        w_dec=w_dec, b_dec=b_dec,
        pe=positional_encoding(64, D_MODEL),
    )


def reference_forward(src, p):
    """Pure-JAX (float32) replica of the PyTorch forward (eval mode)."""
    S, B, _ = src.shape
    x = jnp.einsum("sbi,di->sbd", src, p["w_enc"]) + p["b_enc"]
    x = x + p["pe"][:S][:, None, :]

    qkv = jnp.einsum("sbd,ed->sbe", x, p["w_in"]) + p["b_in"]
    q, k, v = jnp.split(qkv, 3, axis=-1)
    hd = D_MODEL // NHEAD
    qh = q.reshape(S, B, NHEAD, hd)
    kh = k.reshape(S, B, NHEAD, hd)
    vh = v.reshape(S, B, NHEAD, hd)
    logits = jnp.einsum("ibhd,jbhd->bhij", qh, kh) / math.sqrt(hd)
    w = jax.nn.softmax(logits, axis=-1)
    attn = jnp.einsum("bhij,jbhd->ibhd", w, vh).reshape(S, B, D_MODEL)
    attn = jnp.einsum("sbd,ed->sbe", attn, p["w_out"]) + p["b_out"]

    def ln(z, g, b):
        mu = z.mean(-1, keepdims=True)
        var = ((z - mu) ** 2).mean(-1, keepdims=True)
        return (z - mu) / jnp.sqrt(var + LN_EPS) * g + b

    y = ln(x + attn, p["ln1_w"], p["ln1_b"])
    h = jax.nn.relu(jnp.einsum("sbd,fd->sbf", y, p["w_ff1"]) + p["b_ff1"])
    f = jnp.einsum("sbf,df->sbd", h, p["w_ff2"]) + p["b_ff2"]
    y = ln(y + f, p["ln2_w"], p["ln2_b"])
    return y[-1] @ p["w_dec"].T + p["b_dec"]


if __name__ == "__main__":
    key = jax.random.PRNGKey(0)
    pkey, xkey = jax.random.split(key)
    params = init_params(pkey)

    S, B = 8, 2
    src = jax.random.normal(xkey, (S, B, INPUT_DIM), jnp.float32)

    out = stock_transformer_forward(src, params)
    out = jax.block_until_ready(out)

    ref = reference_forward(src, params)
    assert out.shape == (B, OUTPUT_DIM), out.shape
    assert bool(jnp.all(jnp.isfinite(out)))
    # FFN matmuls use bf16 operands (f32 accumulation) per perf guidance, plus an
    # approximate-reciprocal softmax normalization, so compare against the pure
    # f32 reference with a slightly relaxed tolerance.
    assert bool(jnp.allclose(out, ref, atol=2e-2, rtol=2e-2)), (out, ref)

    print("KERNEL_OK")
</pallas_src>

<mosaic_0001>
module attributes {stable_mosaic.version = 11 : i64} {
  func.func @kernel(%arg0: i32, %arg1: memref<64x5xf32, #tpu.memory_space<vmem>>, %arg2: memref<64x4xf32, #tpu.memory_space<vmem>>, %arg3: memref<5x4xf32, #tpu.memory_space<vmem>>, %arg4: memref<4x12xf32, #tpu.memory_space<vmem>>, %arg5: memref<1x12xf32, #tpu.memory_space<vmem>>, %arg6: memref<4x4xf32, #tpu.memory_space<vmem>>, %arg7: memref<1x4xf32, #tpu.memory_space<vmem>>, %arg8: memref<4x2048xbf16, #tpu.memory_space<vmem>>, %arg9: memref<1x2048xf32, #tpu.memory_space<vmem>>, %arg10: memref<2048x4xbf16, #tpu.memory_space<vmem>>, %arg11: memref<1x4xf32, #tpu.memory_space<vmem>>, %arg12: memref<1x4xf32, #tpu.memory_space<vmem>>, %arg13: memref<1x4xf32, #tpu.memory_space<vmem>>, %arg14: memref<1x4xf32, #tpu.memory_space<vmem>>, %arg15: memref<1x4xf32, #tpu.memory_space<vmem>>, %arg16: memref<4x1xf32, #tpu.memory_space<vmem>>, %arg17: memref<1x1xf32, #tpu.memory_space<vmem>>, %arg18: memref<1x1x8xf32, #tpu.memory_space<vmem>>) attributes {dimension_semantics = [#tpu.dimension_semantics<parallel>], iteration_bounds = array<i64: 1>, scalar_prefetch = 0 : i64, scratch_operands = 0 : i64, tpu.core_type = #tpu.core_type<tc>, window_params = [{transform_indices = @transform_0, window_bounds = array<i64: 64, 5>}, {pipeline_mode = #tpu.pipeline_mode<synchronous>, transform_indices = @transform_1, window_bounds = array<i64: 64, 4>}, {pipeline_mode = #tpu.pipeline_mode<synchronous>, transform_indices = @transform_2, window_bounds = array<i64: 5, 4>}, {pipeline_mode = #tpu.pipeline_mode<synchronous>, transform_indices = @transform_3, window_bounds = array<i64: 4, 12>}, {pipeline_mode = #tpu.pipeline_mode<synchronous>, transform_indices = @transform_4, window_bounds = array<i64: 1, 12>}, {pipeline_mode = #tpu.pipeline_mode<synchronous>, transform_indices = @transform_5, window_bounds = array<i64: 4, 4>}, {pipeline_mode = #tpu.pipeline_mode<synchronous>, transform_indices = @transform_6, window_bounds = array<i64: 1, 4>}, {pipeline_mode = #tpu.pipeline_mode<synchronous>, transform_indices = @transform_7, window_bounds = array<i64: 4, 2048>}, {pipeline_mode = #tpu.pipeline_mode<synchronous>, transform_indices = @transform_8, window_bounds = array<i64: 1, 2048>}, {pipeline_mode = #tpu.pipeline_mode<synchronous>, transform_indices = @transform_9, window_bounds = array<i64: 2048, 4>}, {pipeline_mode = #tpu.pipeline_mode<synchronous>, transform_indices = @transform_10, window_bounds = array<i64: 1, 4>}, {pipeline_mode = #tpu.pipeline_mode<synchronous>, transform_indices = @transform_11, window_bounds = array<i64: 1, 4>}, {pipeline_mode = #tpu.pipeline_mode<synchronous>, transform_indices = @transform_12, window_bounds = array<i64: 1, 4>}, {pipeline_mode = #tpu.pipeline_mode<synchronous>, transform_indices = @transform_13, window_bounds = array<i64: 1, 4>}, {pipeline_mode = #tpu.pipeline_mode<synchronous>, transform_indices = @transform_14, window_bounds = array<i64: 1, 4>}, {pipeline_mode = #tpu.pipeline_mode<synchronous>, transform_indices = @transform_15, window_bounds = array<i64: 4, 1>}, {pipeline_mode = #tpu.pipeline_mode<synchronous>, transform_indices = @transform_16, window_bounds = array<i64: 1, 1>}, {transform_indices = @transform_17, window_bounds = array<i64: 1, 1, 8>}]} {
    %c0 = arith.constant 0 : index
    %c0_0 = arith.constant 0 : index
    %0 = vector.load %arg1[%c0, %c0_0] : memref<64x5xf32, #tpu.memory_space<vmem>>, vector<64x5xf32>
    %c0_1 = arith.constant 0 : index
    %c0_2 = arith.constant 0 : index
    %1 = vector.load %arg3[%c0_1, %c0_2] : memref<5x4xf32, #tpu.memory_space<vmem>>, vector<5x4xf32>
    %cst = arith.constant dense<0.000000e+00> : vector<64x4xf32>
    %2 = tpu.matmul %0, %1, %cst {dimension_numbers = #tpu.dot_dimension_numbers<[1], [0], [0], [1], [0, 0, 1, 1], [], []>} : vector<64x5xf32>, vector<5x4xf32>, vector<64x4xf32> -> vector<64x4xf32>
    %c0_3 = arith.constant 0 : index
    %c0_4 = arith.constant 0 : index
    %3 = vector.load %arg2[%c0_3, %c0_4] : memref<64x4xf32, #tpu.memory_space<vmem>>, vector<64x4xf32>
    %4 = arith.addf %2, %3 : vector<64x4xf32>
    %c0_5 = arith.constant 0 : index
    %c0_6 = arith.constant 0 : index
    %5 = vector.load %arg4[%c0_5, %c0_6] : memref<4x12xf32, #tpu.memory_space<vmem>>, vector<4x12xf32>
    %cst_7 = arith.constant dense<0.000000e+00> : vector<64x12xf32>
    %6 = tpu.matmul %4, %5, %cst_7 {dimension_numbers = #tpu.dot_dimension_numbers<[1], [0], [0], [1], [0, 0, 1, 1], [], []>} : vector<64x4xf32>, vector<4x12xf32>, vector<64x12xf32> -> vector<64x12xf32>
    %c0_8 = arith.constant 0 : index
    %c0_9 = arith.constant 0 : index
    %7 = vector.load %arg5[%c0_8, %c0_9] : memref<1x12xf32, #tpu.memory_space<vmem>>, vector<1x12xf32>
    %8 = vector.broadcast %7 : vector<1x12xf32> to vector<64x12xf32>
    %9 = arith.addf %6, %8 : vector<64x12xf32>
    %10 = vector.shape_cast %4 : vector<64x4xf32> to vector<8x8x4xf32>
    %11 = vector.shape_cast %9 : vector<64x12xf32> to vector<8x8x12xf32>
    %12 = vector.extract_strided_slice %10 {offsets = [0, 7, 0], sizes = [8, 1, 4], strides = [1, 1, 1]} : vector<8x8x4xf32> to vector<8x1x4xf32>
    %13 = vector.shape_cast %12 : vector<8x1x4xf32> to vector<8x4xf32>
    %14 = vector.extract_strided_slice %11 {offsets = [0, 7, 0], sizes = [8, 1, 4], strides = [1, 1, 1]} : vector<8x8x12xf32> to vector<8x1x4xf32>
    %15 = vector.shape_cast %14 : vector<8x1x4xf32> to vector<8x4xf32>
    %cst_10 = arith.constant 1.000000e+00 : f32
    %16 = vector.broadcast %cst_10 : f32 to vector<8x4xf32>
    %17 = arith.mulf %15, %16 : vector<8x4xf32>
    %18 = vector.extract_strided_slice %11 {offsets = [0, 0, 4], sizes = [8, 8, 4], strides = [1, 1, 1]} : vector<8x8x12xf32> to vector<8x8x4xf32>
    %19 = vector.extract_strided_slice %11 {offsets = [0, 0, 8], sizes = [8, 8, 4], strides = [1, 1, 1]} : vector<8x8x12xf32> to vector<8x8x4xf32>
    %20 = vector.shape_cast %17 : vector<8x4xf32> to vector<8x1x4xf32>
    %21 = vector.broadcast %20 : vector<8x1x4xf32> to vector<8x8x4xf32>
    %22 = arith.mulf %21, %18 : vector<8x8x4xf32>
    %cst_11 = arith.constant dense<0xFF800000> : vector<8x4xf32>
    %23 = vector.multi_reduction <maximumf>, %22, %cst_11 [1] : vector<8x8x4xf32> to vector<8x4xf32>
    %24 = vector.shape_cast %23 : vector<8x4xf32> to vector<8x1x4xf32>
    %25 = vector.broadcast %24 : vector<8x1x4xf32> to vector<8x8x4xf32>
    %26 = arith.subf %22, %25 : vector<8x8x4xf32>
    %27 = math.exp %26 : vector<8x8x4xf32>
    %cst_12 = arith.constant dense<0.000000e+00> : vector<8x4xf32>
    %28 = vector.multi_reduction <add>, %27, %cst_12 [1] : vector<8x8x4xf32> to vector<8x4xf32>
    %29 = arith.mulf %27, %19 : vector<8x8x4xf32>
    %cst_13 = arith.constant dense<0.000000e+00> : vector<8x4xf32>
    %30 = vector.multi_reduction <add>, %29, %cst_13 [1] : vector<8x8x4xf32> to vector<8x4xf32>
    %31 = tpu.reciprocal %28 {approx = true} : vector<8x4xf32> -> vector<8x4xf32>
    %32 = arith.mulf %30, %31 : vector<8x4xf32>
    %c0_14 = arith.constant 0 : index
    %c0_15 = arith.constant 0 : index
    %33 = vector.load %arg6[%c0_14, %c0_15] : memref<4x4xf32, #tpu.memory_space<vmem>>, vector<4x4xf32>
    %cst_16 = arith.constant dense<0.000000e+00> : vector<8x4xf32>
    %34 = tpu.matmul %32, %33, %cst_16 {dimension_numbers = #tpu.dot_dimension_numbers<[1], [0], [0], [1], [0, 0, 1, 1], [], []>} : vector<8x4xf32>, vector<4x4xf32>, vector<8x4xf32> -> vector<8x4xf32>
    %c0_17 = arith.constant 0 : index
    %c0_18 = arith.constant 0 : index
    %35 = vector.load %arg7[%c0_17, %c0_18] : memref<1x4xf32, #tpu.memory_space<vmem>>, vector<1x4xf32>
    %36 = vector.broadcast %35 : vector<1x4xf32> to vector<8x4xf32>
    %37 = arith.addf %34, %36 : vector<8x4xf32>
    %38 = arith.addf %13, %37 : vector<8x4xf32>
    %c0_19 = arith.constant 0 : index
    %c0_20 = arith.constant 0 : index
    %39 = vector.load %arg12[%c0_19, %c0_20] : memref<1x4xf32, #tpu.memory_space<vmem>>, vector<1x4xf32>
    %c0_21 = arith.constant 0 : index
    %c0_22 = arith.constant 0 : index
    %40 = vector.load %arg13[%c0_21, %c0_22] : memref<1x4xf32, #tpu.memory_space<vmem>>, vector<1x4xf32>
    %cst_23 = arith.constant dense<0.000000e+00> : vector<8xf32>
    %41 = vector.multi_reduction <add>, %38, %cst_23 [1] : vector<8x4xf32> to vector<8xf32>
    %42 = vector.shape_cast %41 : vector<8xf32> to vector<8x1xf32>
    %cst_24 = arith.constant 4.000000e+00 : f32
    %43 = vector.broadcast %cst_24 : f32 to vector<8x1xf32>
    %44 = arith.divf %42, %43 : vector<8x1xf32>
    %45 = vector.broadcast %44 : vector<8x1xf32> to vector<8x4xf32>
    %46 = arith.subf %38, %45 : vector<8x4xf32>
    %47 = arith.mulf %46, %46 : vector<8x4xf32>
    %cst_25 = arith.constant dense<0.000000e+00> : vector<8xf32>
    %48 = vector.multi_reduction <add>, %47, %cst_25 [1] : vector<8x4xf32> to vector<8xf32>
    %49 = vector.shape_cast %48 : vector<8xf32> to vector<8x1xf32>
    %cst_26 = arith.constant 4.000000e+00 : f32
    %50 = vector.broadcast %cst_26 : f32 to vector<8x1xf32>
    %51 = arith.divf %49, %50 : vector<8x1xf32>
    %52 = vector.broadcast %44 : vector<8x1xf32> to vector<8x4xf32>
    %53 = arith.subf %38, %52 : vector<8x4xf32>
    %cst_27 = arith.constant 9.99999974E-6 : f32
    %54 = vector.broadcast %cst_27 : f32 to vector<8x1xf32>
    %55 = arith.addf %51, %54 : vector<8x1xf32>
    %56 = math.rsqrt %55 : vector<8x1xf32>
    %57 = vector.broadcast %56 : vector<8x1xf32> to vector<8x4xf32>
    %58 = arith.mulf %53, %57 : vector<8x4xf32>
    %59 = vector.broadcast %39 : vector<1x4xf32> to vector<8x4xf32>
    %60 = arith.mulf %58, %59 : vector<8x4xf32>
    %61 = vector.broadcast %40 : vector<1x4xf32> to vector<8x4xf32>
    %62 = arith.addf %60, %61 : vector<8x4xf32>
    %63 = arith.truncf %62 : vector<8x4xf32> to vector<8x4xbf16>
    %c0_28 = arith.constant 0 : index
    %c0_29 = arith.constant 0 : index
    %64 = vector.load %arg8[%c0_28, %c0_29] : memref<4x2048xbf16, #tpu.memory_space<vmem>>, vector<4x2048xbf16>
    %cst_30 = arith.constant dense<0.000000e+00> : vector<8x2048xf32>
    %65 = tpu.matmul %63, %64, %cst_30 {dimension_numbers = #tpu.dot_dimension_numbers<[1], [0], [0], [1], [0, 0, 1, 1], [], []>} : vector<8x4xbf16>, vector<4x2048xbf16>, vector<8x2048xf32> -> vector<8x2048xf32>
    %c0_31 = arith.constant 0 : index
    %c0_32 = arith.constant 0 : index
    %66 = vector.load %arg9[%c0_31, %c0_32] : memref<1x2048xf32, #tpu.memory_space<vmem>>, vector<1x2048xf32>
    %67 = vector.broadcast %66 : vector<1x2048xf32> to vector<8x2048xf32>
    %68 = arith.addf %65, %67 : vector<8x2048xf32>
    %cst_33 = arith.constant 0.000000e+00 : f32
    %69 = vector.broadcast %cst_33 : f32 to vector<8x2048xf32>
    %70 = arith.maximumf %68, %69 : vector<8x2048xf32>
    %71 = arith.truncf %70 : vector<8x2048xf32> to vector<8x2048xbf16>
    %c0_34 = arith.constant 0 : index
    %c0_35 = arith.constant 0 : index
    %72 = vector.load %arg10[%c0_34, %c0_35] : memref<2048x4xbf16, #tpu.memory_space<vmem>>, vector<2048x4xbf16>
    %cst_36 = arith.constant dense<0.000000e+00> : vector<8x4xf32>
    %73 = tpu.matmul %71, %72, %cst_36 {dimension_numbers = #tpu.dot_dimension_numbers<[1], [0], [0], [1], [0, 0, 1, 1], [], []>} : vector<8x2048xbf16>, vector<2048x4xbf16>, vector<8x4xf32> -> vector<8x4xf32>
    %c0_37 = arith.constant 0 : index
    %c0_38 = arith.constant 0 : index
    %74 = vector.load %arg11[%c0_37, %c0_38] : memref<1x4xf32, #tpu.memory_space<vmem>>, vector<1x4xf32>
    %75 = vector.broadcast %74 : vector<1x4xf32> to vector<8x4xf32>
    %76 = arith.addf %73, %75 : vector<8x4xf32>
    %77 = arith.addf %62, %76 : vector<8x4xf32>
    %c0_39 = arith.constant 0 : index
    %c0_40 = arith.constant 0 : index
    %78 = vector.load %arg14[%c0_39, %c0_40] : memref<1x4xf32, #tpu.memory_space<vmem>>, vector<1x4xf32>
    %c0_41 = arith.constant 0 : index
    %c0_42 = arith.constant 0 : index
    %79 = vector.load %arg15[%c0_41, %c0_42] : memref<1x4xf32, #tpu.memory_space<vmem>>, vector<1x4xf32>
    %cst_43 = arith.constant dense<0.000000e+00> : vector<8xf32>
    %80 = vector.multi_reduction <add>, %77, %cst_43 [1] : vector<8x4xf32> to vector<8xf32>
    %81 = vector.shape_cast %80 : vector<8xf32> to vector<8x1xf32>
    %cst_44 = arith.constant 4.000000e+00 : f32
    %82 = vector.broadcast %cst_44 : f32 to vector<8x1xf32>
    %83 = arith.divf %81, %82 : vector<8x1xf32>
    %84 = vector.broadcast %83 : vector<8x1xf32> to vector<8x4xf32>
    %85 = arith.subf %77, %84 : vector<8x4xf32>
    %86 = arith.mulf %85, %85 : vector<8x4xf32>
    %cst_45 = arith.constant dense<0.000000e+00> : vector<8xf32>
    %87 = vector.multi_reduction <add>, %86, %cst_45 [1] : vector<8x4xf32> to vector<8xf32>
    %88 = vector.shape_cast %87 : vector<8xf32> to vector<8x1xf32>
    %cst_46 = arith.constant 4.000000e+00 : f32
    %89 = vector.broadcast %cst_46 : f32 to vector<8x1xf32>
    %90 = arith.divf %88, %89 : vector<8x1xf32>
    %91 = vector.broadcast %83 : vector<8x1xf32> to vector<8x4xf32>
    %92 = arith.subf %77, %91 : vector<8x4xf32>
    %cst_47 = arith.constant 9.99999974E-6 : f32
    %93 = vector.broadcast %cst_47 : f32 to vector<8x1xf32>
    %94 = arith.addf %90, %93 : vector<8x1xf32>
    %95 = math.rsqrt %94 : vector<8x1xf32>
    %96 = vector.broadcast %95 : vector<8x1xf32> to vector<8x4xf32>
    %97 = arith.mulf %92, %96 : vector<8x4xf32>
    %98 = vector.broadcast %78 : vector<1x4xf32> to vector<8x4xf32>
    %99 = arith.mulf %97, %98 : vector<8x4xf32>
    %100 = vector.broadcast %79 : vector<1x4xf32> to vector<8x4xf32>
    %101 = arith.addf %99, %100 : vector<8x4xf32>
    %102 = tpu.transpose %101, [1, 0] : vector<8x4xf32> -> vector<4x8xf32>
    %c0_48 = arith.constant 0 : index
    %c0_49 = arith.constant 0 : index
    %103 = vector.load %arg16[%c0_48, %c0_49] : memref<4x1xf32, #tpu.memory_space<vmem>>, vector<4x1xf32>
    %104 = vector.broadcast %103 : vector<4x1xf32> to vector<4x8xf32>
    %105 = arith.mulf %102, %104 : vector<4x8xf32>
    %cst_50 = arith.constant dense<0.000000e+00> : vector<8xf32>
    %106 = vector.multi_reduction <add>, %105, %cst_50 [0] : vector<4x8xf32> to vector<8xf32>
    %107 = vector.shape_cast %106 : vector<8xf32> to vector<1x8xf32>
    %c0_51 = arith.constant 0 : index
    %c0_52 = arith.constant 0 : index
    %108 = vector.load %arg17[%c0_51, %c0_52] : memref<1x1xf32, #tpu.memory_space<vmem>>, vector<1x1xf32>
    %109 = vector.broadcast %108 : vector<1x1xf32> to vector<1x8xf32>
    %110 = arith.addf %107, %109 : vector<1x8xf32>
    %c0_53 = arith.constant 0 : index
    %c0_54 = arith.constant 0 : index
    %c0_55 = arith.constant 0 : index
    %111 = vector.load %arg18[%c0_53, %c0_54, %c0_55] : memref<1x1x8xf32, #tpu.memory_space<vmem>>, vector<1x1x8xf32>
    %112 = vector.shape_cast %111 : vector<1x1x8xf32> to vector<1x8xf32>
    %113 = vector.shape_cast %110 : vector<1x8xf32> to vector<1x1x8xf32>
    tpu.vector_store %arg18[%c0_53, %c0_54, %c0_55], %113 {strides = array<i32>} : memref<1x1x8xf32, #tpu.memory_space<vmem>>, vector<1x1x8xf32>,
    return
  }
  func.func @transform_0(%arg0: i32) -> (i32, i32) {
    %c0_i32 = arith.constant 0 : i32
    %c0_i32_0 = arith.constant 0 : i32
    return %arg0, %c0_i32 : i32, i32
  }
  func.func @transform_1(%arg0: i32) -> (i32, i32) {
    %c0_i32 = arith.constant 0 : i32
    %c0_i32_0 = arith.constant 0 : i32
    %c0_i32_1 = arith.constant 0 : i32
    return %c0_i32, %c0_i32_0 : i32, i32
  }
  func.func @transform_2(%arg0: i32) -> (i32, i32) {
    %c0_i32 = arith.constant 0 : i32
    %c0_i32_0 = arith.constant 0 : i32
    %c0_i32_1 = arith.constant 0 : i32
    return %c0_i32, %c0_i32_0 : i32, i32
  }
  func.func @transform_3(%arg0: i32) -> (i32, i32) {
    %c0_i32 = arith.constant 0 : i32
    %c0_i32_0 = arith.constant 0 : i32
    %c0_i32_1 = arith.constant 0 : i32
    return %c0_i32, %c0_i32_0 : i32, i32
  }
  func.func @transform_4(%arg0: i32) -> (i32, i32) {
    %c0_i32 = arith.constant 0 : i32
    %c0_i32_0 = arith.constant 0 : i32
    %c0_i32_1 = arith.constant 0 : i32
    return %c0_i32, %c0_i32_0 : i32, i32
  }
  func.func @transform_5(%arg0: i32) -> (i32, i32) {
    %c0_i32 = arith.constant 0 : i32
    %c0_i32_0 = arith.constant 0 : i32
    %c0_i32_1 = arith.constant 0 : i32
    return %c0_i32, %c0_i32_0 : i32, i32
  }
  func.func @transform_6(%arg0: i32) -> (i32, i32) {
    %c0_i32 = arith.constant 0 : i32
    %c0_i32_0 = arith.constant 0 : i32
    %c0_i32_1 = arith.constant 0 : i32
    return %c0_i32, %c0_i32_0 : i32, i32
  }
  func.func @transform_7(%arg0: i32) -> (i32, i32) {
    %c0_i32 = arith.constant 0 : i32
    %c0_i32_0 = arith.constant 0 : i32
    %c0_i32_1 = arith.constant 0 : i32
    return %c0_i32, %c0_i32_0 : i32, i32
  }
  func.func @transform_8(%arg0: i32) -> (i32, i32) {
    %c0_i32 = arith.constant 0 : i32
    %c0_i32_0 = arith.constant 0 : i32
    %c0_i32_1 = arith.constant 0 : i32
    return %c0_i32, %c0_i32_0 : i32, i32
  }
  func.func @transform_9(%arg0: i32) -> (i32, i32) {
    %c0_i32 = arith.constant 0 : i32
    %c0_i32_0 = arith.constant 0 : i32
    %c0_i32_1 = arith.constant 0 : i32
    return %c0_i32, %c0_i32_0 : i32, i32
  }
  func.func @transform_10(%arg0: i32) -> (i32, i32) {
    %c0_i32 = arith.constant 0 : i32
    %c0_i32_0 = arith.constant 0 : i32
    %c0_i32_1 = arith.constant 0 : i32
    return %c0_i32, %c0_i32_0 : i32, i32
  }
  func.func @transform_11(%arg0: i32) -> (i32, i32) {
    %c0_i32 = arith.constant 0 : i32
    %c0_i32_0 = arith.constant 0 : i32
    %c0_i32_1 = arith.constant 0 : i32
    return %c0_i32, %c0_i32_0 : i32, i32
  }
  func.func @transform_12(%arg0: i32) -> (i32, i32) {
    %c0_i32 = arith.constant 0 : i32
    %c0_i32_0 = arith.constant 0 : i32
    %c0_i32_1 = arith.constant 0 : i32
    return %c0_i32, %c0_i32_0 : i32, i32
  }
  func.func @transform_13(%arg0: i32) -> (i32, i32) {
    %c0_i32 = arith.constant 0 : i32
    %c0_i32_0 = arith.constant 0 : i32
    %c0_i32_1 = arith.constant 0 : i32
    return %c0_i32, %c0_i32_0 : i32, i32
  }
  func.func @transform_14(%arg0: i32) -> (i32, i32) {
    %c0_i32 = arith.constant 0 : i32
    %c0_i32_0 = arith.constant 0 : i32
    %c0_i32_1 = arith.constant 0 : i32
    return %c0_i32, %c0_i32_0 : i32, i32
  }
  func.func @transform_15(%arg0: i32) -> (i32, i32) {
    %c0_i32 = arith.constant 0 : i32
    %c0_i32_0 = arith.constant 0 : i32
    %c0_i32_1 = arith.constant 0 : i32
    return %c0_i32, %c0_i32_0 : i32, i32
  }
  func.func @transform_16(%arg0: i32) -> (i32, i32) {
    %c0_i32 = arith.constant 0 : i32
    %c0_i32_0 = arith.constant 0 : i32
    %c0_i32_1 = arith.constant 0 : i32
    return %c0_i32, %c0_i32_0 : i32, i32
  }
  func.func @transform_17(%arg0: i32) -> (i32, i32, i32) {
    %c0_i32 = arith.constant 0 : i32
    %c0_i32_0 = arith.constant 0 : i32
    %c0_i32_1 = arith.constant 0 : i32
    return %arg0, %c0_i32, %c0_i32_0 : i32, i32, i32
  }
}

</mosaic_0001>

<llo_original>
// kernel: tpu_custom_call.1
$region0: #{tpu_custom_call.1}
  #allocation0 [shape = 'u32[]', space=smem, size = 0x4, offset = 0x4, fixed_abs, tag = 'smem constant byte address 0x4 - core index']
  #allocation1 [shape = 'u32[144,128]{1,0:T(1,128)}', space=vmem, size = 0x12000, scoped, tag = 'internal scratch']
  #allocation2 [shape = 'f32[1,1]{1,0:T(1,128)S(1)}', space=vmem, size = 0x200, scoped, tag = 'scoped memory for tpu_custom_call.1']
  %s0 = inlined_call_operand.vmem [shape: f32[64,5], index: 0, kind: input, shape index: {}]
  %s1 = inlined_call_operand.vmem [shape: f32[64,4], index: 1, kind: input, shape index: {}]
  %s2 = inlined_call_operand.vmem [shape: f32[5,4], index: 2, kind: input, shape index: {}]
  %s3 = inlined_call_operand.vmem [shape: f32[4,12], index: 3, kind: input, shape index: {}]
  %s4 = inlined_call_operand.vmem [shape: f32[1,12], index: 4, kind: input, shape index: {}]
  %s5 = inlined_call_operand.vmem [shape: f32[4,4], index: 5, kind: input, shape index: {}]
  %s6 = inlined_call_operand.vmem [shape: f32[1,4], index: 6, kind: input, shape index: {}]
  %s7 = inlined_call_operand.vmem [shape: bf16[4,2048], index: 7, kind: input, shape index: {}]
  %s8 = inlined_call_operand.vmem [shape: f32[1,2048], index: 8, kind: input, shape index: {}]
  %s9 = inlined_call_operand.vmem [shape: bf16[2048,4], index: 9, kind: input, shape index: {}]
  %s10 = inlined_call_operand.vmem [shape: f32[1,4], index: 10, kind: input, shape index: {}]
  %s11 = inlined_call_operand.vmem [shape: f32[1,4], index: 11, kind: input, shape index: {}]
  %s12 = inlined_call_operand.vmem [shape: f32[1,4], index: 12, kind: input, shape index: {}]
  %s13 = inlined_call_operand.vmem [shape: f32[1,4], index: 13, kind: input, shape index: {}]
  %s14 = inlined_call_operand.vmem [shape: f32[1,4], index: 14, kind: input, shape index: {}]
  %s15 = inlined_call_operand.vmem [shape: f32[4,1], index: 15, kind: input, shape index: {}]
  %s16 = inlined_call_operand.<no memory space> [shape: f32[1,1], index: 16, kind: input, shape index: {}]
  %s17 = inlined_call_operand.hbm [shape: f32[1,1,8], index: 17, kind: output, shape index: {}]
  %s18 = sld [smem:[#allocation0]]
  $region78: #{tpu_custom_call.1} parent=0
    _
  %s20 = ssub.s32 1, %s18
  %s21 = scalar_select 0, %s20, %s18
  %v22 = vstv %s16
  %23 = vst [vmem:[#allocation2] sm:$0x1] %v22
  $region1: #{tpu_custom_call.1} parent=0
    #allocation3 [shape = 'u8[512]{0}', space=vmem, size = 0x400, scoped, tag = 'output window, operand 0, single buffered']
    #allocation4 [shape = 's32[1]{0}', space=sflag, size = 0x4, scoped, tag = 'scoped memory for tpu_custom_call.1']
    %24 = vsyncpa [#allocation4], 0
    // Predicated region
    $region2: #{tpu_custom_call.1} parent=1 // pred_check
      _
    $region3: #{tpu_custom_call.1} parent=1 // pred_check_branch
      %26 = sbr.rel (0) target = $region5
    $region4: #{tpu_custom_call.1} parent=1 // pred_region
      _
    $region5: #{tpu_custom_call.1} parent=1 // pred_fallthru
      _
    // Predicated region
    $region6: #{tpu_custom_call.1} parent=1 // pred_check
      _
    $region7: #{tpu_custom_call.1} parent=1 // pred_check_branch
      %28 = sbr.rel (0) target = $region9
    $region8: #{tpu_custom_call.1} parent=1 // pred_region
      _
    $region9: #{tpu_custom_call.1} parent=1 // pred_fallthru
      _
    // Predicated region
    $region10: #{tpu_custom_call.1} parent=1 // pred_check
      _
    $region11: #{tpu_custom_call.1} parent=1 // pred_check_branch
      %30 = sbr.rel (0) target = $region13
    $region12: #{tpu_custom_call.1} parent=1 // pred_region
      _
    $region13: #{tpu_custom_call.1} parent=1 // pred_fallthru
      _
    // Predicated region
    $region14: #{tpu_custom_call.1} parent=1 // pred_check
      _
    $region15: #{tpu_custom_call.1} parent=1 // pred_check_branch
      %32 = sbr.rel (0) target = $region17
    $region16: #{tpu_custom_call.1} parent=1 // pred_region
      _
    $region17: #{tpu_custom_call.1} parent=1 // pred_fallthru
      _
    // Predicated region
    $region18: #{tpu_custom_call.1} parent=1 // pred_check
      _
    $region19: #{tpu_custom_call.1} parent=1 // pred_check_branch
      %34 = sbr.rel (0) target = $region21
    $region20: #{tpu_custom_call.1} parent=1 // pred_region
      _
    $region21: #{tpu_custom_call.1} parent=1 // pred_fallthru
      _
    // Predicated region
    $region22: #{tpu_custom_call.1} parent=1 // pred_check
      _
    $region23: #{tpu_custom_call.1} parent=1 // pred_check_branch
      %36 = sbr.rel (0) target = $region25
    $region24: #{tpu_custom_call.1} parent=1 // pred_region
      _
    $region25: #{tpu_custom_call.1} parent=1 // pred_fallthru
      _
    // Predicated region
    $region26: #{tpu_custom_call.1} parent=1 // pred_check
      _
    $region27: #{tpu_custom_call.1} parent=1 // pred_check_branch
      %38 = sbr.rel (0) target = $region29
    $region28: #{tpu_custom_call.1} parent=1 // pred_region
      _
    $region29: #{tpu_custom_call.1} parent=1 // pred_fallthru
      _
    // Predicated region
    $region30: #{tpu_custom_call.1} parent=1 // pred_check
      _
    $region31: #{tpu_custom_call.1} parent=1 // pred_check_branch
      %40 = sbr.rel (0) target = $region33
    $region32: #{tpu_custom_call.1} parent=1 // pred_region
      _
    $region33: #{tpu_custom_call.1} parent=1 // pred_fallthru
      _
    // Predicated region
    $region34: #{tpu_custom_call.1} parent=1 // pred_check
      _
    $region35: #{tpu_custom_call.1} parent=1 // pred_check_branch
      %42 = sbr.rel (0) target = $region37
    $region36: #{tpu_custom_call.1} parent=1 // pred_region
      _
    $region37: #{tpu_custom_call.1} parent=1 // pred_fallthru
      _
    // Predicated region
    $region38: #{tpu_custom_call.1} parent=1 // pred_check
      _
    $region39: #{tpu_custom_call.1} parent=1 // pred_check_branch
      %44 = sbr.rel (0) target = $region41
    $region40: #{tpu_custom_call.1} parent=1 // pred_region
      _
    $region41: #{tpu_custom_call.1} parent=1 // pred_fallthru
      _
    // Predicated region
    $region42: #{tpu_custom_call.1} parent=1 // pred_check
      _
    $region43: #{tpu_custom_call.1} parent=1 // pred_check_branch
      %46 = sbr.rel (0) target = $region45
    $region44: #{tpu_custom_call.1} parent=1 // pred_region
      _
    $region45: #{tpu_custom_call.1} parent=1 // pred_fallthru
      _
    // Predicated region
    $region46: #{tpu_custom_call.1} parent=1 // pred_check
      _
    $region47: #{tpu_custom_call.1} parent=1 // pred_check_branch
      %48 = sbr.rel (0) target = $region49
    $region48: #{tpu_custom_call.1} parent=1 // pred_region
      _
    $region49: #{tpu_custom_call.1} parent=1 // pred_fallthru
      _
    // Predicated region
    $region50: #{tpu_custom_call.1} parent=1 // pred_check
      _
    $region51: #{tpu_custom_call.1} parent=1 // pred_check_branch
      %50 = sbr.rel (0) target = $region53
    $region52: #{tpu_custom_call.1} parent=1 // pred_region
      _
    $region53: #{tpu_custom_call.1} parent=1 // pred_fallthru
      _
    // Predicated region
    $region54: #{tpu_custom_call.1} parent=1 // pred_check
      _
    $region55: #{tpu_custom_call.1} parent=1 // pred_check_branch
      %52 = sbr.rel (0) target = $region57
    $region56: #{tpu_custom_call.1} parent=1 // pred_region
      _
    $region57: #{tpu_custom_call.1} parent=1 // pred_fallthru
      _
    // Predicated region
    $region58: #{tpu_custom_call.1} parent=1 // pred_check
      _
    $region59: #{tpu_custom_call.1} parent=1 // pred_check_branch
      %54 = sbr.rel (0) target = $region61
    $region60: #{tpu_custom_call.1} parent=1 // pred_region
      _
    $region61: #{tpu_custom_call.1} parent=1 // pred_fallthru
      _
    // Predicated region
    $region62: #{tpu_custom_call.1} parent=1 // pred_check
      _
    $region63: #{tpu_custom_call.1} parent=1 // pred_check_branch
      %56 = sbr.rel (0) target = $region65
    $region64: #{tpu_custom_call.1} parent=1 // pred_region
      _
    $region65: #{tpu_custom_call.1} parent=1 // pred_fallthru
      _
    // Predicated region
    $region66: #{tpu_custom_call.1} parent=1 // pred_check
      _
    $region67: #{tpu_custom_call.1} parent=1 // pred_check_branch
      %58 = sbr.rel (0) target = $region69
    $region68: #{tpu_custom_call.1} parent=1 // pred_region
      _
    $region69: #{tpu_custom_call.1} parent=1 // pred_fallthru
      _
    %v60 = vld [vmem:[%s0] sm:$0xff]
    %v61 = vld [vmem:[%s0 + $0x8] sm:$0xff]
    %v62 = vld [vmem:[%s0 + $0x10] sm:$0xff]
    %v63 = vld [vmem:[%s0 + $0x18] sm:$0xff]
    %v64 = vld [vmem:[%s0 + $0x20] sm:$0xff]
    %v65 = vld [vmem:[%s0 + $0x28] sm:$0xff]
    %v66 = vld [vmem:[%s0 + $0x30] sm:$0xff]
    %v67 = vld [vmem:[%s0 + $0x38] sm:$0xff]
    %v68 = vld [vmem:[%s2] sm:$0x1f]
    %v69 = vld [vmem:[%s1] sm:$0xff]
    %v70 = vld [vmem:[%s1 + $0x8] sm:$0xff]
    %v71 = vld [vmem:[%s1 + $0x10] sm:$0xff]
    %v72 = vld [vmem:[%s1 + $0x18] sm:$0xff]
    %v73 = vld [vmem:[%s1 + $0x20] sm:$0xff]
    %v74 = vld [vmem:[%s1 + $0x28] sm:$0xff]
    %v75 = vld [vmem:[%s1 + $0x30] sm:$0xff]
    %v76 = vld [vmem:[%s1 + $0x38] sm:$0xff]
    %vm77 = vcmask 39936
    %v79 = vsel %vm77, %v60, 0
    %v82 = vsel %vm77, %v61, 0
    %v85 = vsel %vm77, %v62, 0
    %v88 = vsel %vm77, %v63, 0
    %v91 = vsel %vm77, %v64, 0
    %v94 = vsel %vm77, %v65, 0
    %v97 = vsel %vm77, %v66, 0
    %v100 = vsel %vm77, %v67, 0
    %vm102 = vcmask 1044480
    %v104 = vsel %vm102, %v68, 0
    %106 = vmatprep.subr.mxu0 0.0
    %107 = vmatpush1.msra.mxu0 %v104
    %108 = vmatprep.subr.mxu0 0.0
    %109 = vmatpush1.msra.mxu0 0.0
    %110 = vmatprep.subr.mxu0 0.0
    %111 = vmatpush1.msra.mxu0 0.0
    %112 = vmatprep.subr.mxu0 0.0
    %113 = vmatpush1.msra.mxu0 0.0
    %114 = vmatprep.subr.mxu0 0.0
    %115 = vmatpush1.msra.mxu0 0.0
    %116 = vmatprep.subr.mxu0 0.0
    %117 = vmatpush1.msra.mxu0 0.0
    %118 = vmatprep.subr.mxu0 0.0
    %119 = vmatpush1.msra.mxu0 0.0
    %120 = vmatprep.subr.mxu0 0.0
    %121 = vmatpush1.msra.mxu0 0.0
    %122 = vmatprep.subr.mxu0 0.0
    %123 = vmatpush1.msra.mxu0 0.0
    %124 = vmatprep.subr.mxu0 0.0
    %125 = vmatpush1.msra.mxu0 0.0
    %126 = vmatprep.subr.mxu0 0.0
    %127 = vmatpush1.msra.mxu0 0.0
    %128 = vmatprep.subr.mxu0 0.0
    %129 = vmatpush1.msra.mxu0 0.0
    %130 = vmatprep.subr.mxu0 0.0
    %131 = vmatpush1.msra.mxu0 0.0
    %132 = vmatprep.subr.mxu0 0.0
    %133 = vmatpush1.msra.mxu0 0.0
    %134 = vmatprep.subr.mxu0 0.0
    %135 = vmatpush1.msra.mxu0 0.0
    %136 = vmatprep.subr.mxu0 0.0
    %137 = vmatpush1.msra.mxu0 0.0
    %138 = vmatprep.subr.mxu0 0.0
    %139 = vmatpush1.msra.mxu0 0.0
    %140 = vmatprep.subr.mxu0 0.0
    %141 = vmatpush1.msra.mxu0 0.0
    %142 = vmatprep.subr.mxu0 0.0
    %143 = vmatpush1.msra.mxu0 0.0
    %144 = vmatprep.subr.mxu0 0.0
    %145 = vmatpush1.msra.mxu0 0.0
    %146 = vmatprep.subr.mxu0 0.0
    %147 = vmatpush1.msra.mxu0 0.0
    %148 = vmatprep.subr.mxu0 0.0
    %149 = vmatpush1.msra.mxu0 0.0
    %150 = vmatprep.subr.mxu0 0.0
    %151 = vmatpush1.msra.mxu0 0.0
    %152 = vmatprep.subr.mxu0 0.0
    %153 = vmatpush1.msra.mxu0 0.0
    %154 = vmatprep.subr.mxu0 0.0
    %155 = vmatpush1.msra.mxu0 0.0
    %156 = vmatprep.subr.mxu0 0.0
    %157 = vmatpush1.msra.mxu0 0.0
    %158 = vmatprep.subr.mxu0 0.0
    %159 = vmatpush1.msra.mxu0 0.0
    %160 = vmatprep.subr.mxu0 0.0
    %161 = vmatpush1.msra.mxu0 0.0
    %162 = vmatprep.subr.mxu0 0.0
    %163 = vmatpush1.msra.mxu0 0.0
    %164 = vmatprep.subr.mxu0 0.0
    %165 = vmatpush1.msra.mxu0 0.0
    %166 = vmatprep.subr.mxu0 0.0
    %167 = vmatpush1.msra.mxu0 0.0
    %168 = vmatprep.subr.mxu0 0.0
    %169 = vmatpush1.msra.mxu0 0.0
    %170 = vmatprep.mubr.f32.mxu0 0.0
    %171 = vmatmul.mubr.f32.gmra.mrb[0].mxu0 %v79
    %v172 = vpop.f32.mrb[0].mxu0
    %v173 = vadd.f32 %v69, %v172
    %v174 = vpop.f32.mrb[0].mxu0
    %175 = vmatprep.mubr.f32.mxu0 0.0
    %176 = vmatmul.mubr.f32.gmra.mrb[0].mxu0 %v82
    %v177 = vpop.f32.mrb[0].mxu0
    %v178 = vadd.f32 %v70, %v177
    %v179 = vpop.f32.mrb[0].mxu0
    %180 = vmatprep.mubr.f32.mxu0 0.0
    %181 = vmatmul.mubr.f32.gmra.mrb[0].mxu0 %v85
    %v182 = vpop.f32.mrb[0].mxu0
    %v183 = vadd.f32 %v71, %v182
    %v184 = vpop.f32.mrb[0].mxu0
    %185 = vmatprep.mubr.f32.mxu0 0.0
    %186 = vmatmul.mubr.f32.gmra.mrb[0].mxu0 %v88
    %v187 = vpop.f32.mrb[0].mxu0
    %v188 = vadd.f32 %v72, %v187
    %v189 = vpop.f32.mrb[0].mxu0
    %190 = vmatprep.mubr.f32.mxu0 0.0
    %191 = vmatmul.mubr.f32.gmra.mrb[0].mxu0 %v91
    %v192 = vpop.f32.mrb[0].mxu0
    %v193 = vadd.f32 %v73, %v192
    %v194 = vpop.f32.mrb[0].mxu0
    %195 = vmatprep.mubr.f32.mxu0 0.0
    %196 = vmatmul.mubr.f32.gmra.mrb[0].mxu0 %v94
    %v197 = vpop.f32.mrb[0].mxu0
    %v198 = vadd.f32 %v74, %v197
    %v199 = vpop.f32.mrb[0].mxu0
    %200 = vmatprep.mubr.f32.mxu0 0.0
    %201 = vmatmul.mubr.f32.gmra.mrb[0].mxu0 %v97
    %v202 = vpop.f32.mrb[0].mxu0
    %v203 = vadd.f32 %v75, %v202
    %v204 = vpop.f32.mrb[0].mxu0
    %205 = vmatprep.mubr.f32.mxu0 0.0
    %206 = vmatmul.mubr.f32.gmra.mrb[0].mxu0 %v100
    %v207 = vpop.f32.mrb[0].mxu0
    %v208 = vadd.f32 %v76, %v207
    %v209 = vpop.f32.mrb[0].mxu0
    %210 = vdwg.mxu0
    %v211 = vld [vmem:[%s3] sm:$0xf]
    %v212 = vld [vmem:[%s4] sm:$0x1]
    %v214 = vlaneseq
    %v215 = vshrl.u32 %v214, 7
    %v216 = vsub.s32 0, %v215
    %v217 = vrot.slane %v212, %v216
    %vm219 = vcmask 31744
    %v221 = vsel %vm219, %v173, 0
    %v224 = vsel %vm219, %v178, 0
    %v227 = vsel %vm219, %v183, 0
    %v230 = vsel %vm219, %v188, 0
    %v233 = vsel %vm219, %v193, 0
    %v236 = vsel %vm219, %v198, 0
    %v239 = vsel %vm219, %v203, 0
    %v242 = vsel %vm219, %v208, 0
    %vm244 = vcmask 1043456
    %v246 = vsel %vm244, %v211, 0
    %248 = vmatprep.subr.mxu0 0.0
    %249 = vmatpush1.msra.mxu0 %v246
    %250 = vmatprep.subr.mxu0 0.0
    %251 = vmatpush1.msra.mxu0 0.0
    %252 = vmatprep.subr.mxu0 0.0
    %253 = vmatpush1.msra.mxu0 0.0
    %254 = vmatprep.subr.mxu0 0.0
    %255 = vmatpush1.msra.mxu0 0.0
    %256 = vmatprep.subr.mxu0 0.0
    %257 = vmatpush1.msra.mxu0 0.0
    %258 = vmatprep.subr.mxu0 0.0
    %259 = vmatpush1.msra.mxu0 0.0
    %260 = vmatprep.subr.mxu0 0.0
    %261 = vmatpush1.msra.mxu0 0.0
    %262 = vmatprep.subr.mxu0 0.0
    %263 = vmatpush1.msra.mxu0 0.0
    %264 = vmatprep.subr.mxu0 0.0
    %265 = vmatpush1.msra.mxu0 0.0
    %266 = vmatprep.subr.mxu0 0.0
    %267 = vmatpush1.msra.mxu0 0.0
    %268 = vmatprep.subr.mxu0 0.0
    %269 = vmatpush1.msra.mxu0 0.0
    %270 = vmatprep.subr.mxu0 0.0
    %271 = vmatpush1.msra.mxu0 0.0
    %272 = vmatprep.subr.mxu0 0.0
    %273 = vmatpush1.msra.mxu0 0.0
    %274 = vmatprep.subr.mxu0 0.0
    %275 = vmatpush1.msra.mxu0 0.0
    %276 = vmatprep.subr.mxu0 0.0
    %277 = vmatpush1.msra.mxu0 0.0
    %278 = vmatprep.subr.mxu0 0.0
    %279 = vmatpush1.msra.mxu0 0.0
    %280 = vmatprep.subr.mxu0 0.0
    %281 = vmatpush1.msra.mxu0 0.0
    %282 = vmatprep.subr.mxu0 0.0
    %283 = vmatpush1.msra.mxu0 0.0
    %284 = vmatprep.subr.mxu0 0.0
    %285 = vmatpush1.msra.mxu0 0.0
    %286 = vmatprep.subr.mxu0 0.0
    %287 = vmatpush1.msra.mxu0 0.0
    %288 = vmatprep.subr.mxu0 0.0
    %289 = vmatpush1.msra.mxu0 0.0
    %290 = vmatprep.subr.mxu0 0.0
    %291 = vmatpush1.msra.mxu0 0.0
    %292 = vmatprep.subr.mxu0 0.0
    %293 = vmatpush1.msra.mxu0 0.0
    %294 = vmatprep.subr.mxu0 0.0
    %295 = vmatpush1.msra.mxu0 0.0
    %296 = vmatprep.subr.mxu0 0.0
    %297 = vmatpush1.msra.mxu0 0.0
    %298 = vmatprep.subr.mxu0 0.0
    %299 = vmatpush1.msra.mxu0 0.0
    %300 = vmatprep.subr.mxu0 0.0
    %301 = vmatpush1.msra.mxu0 0.0
    %302 = vmatprep.subr.mxu0 0.0
    %303 = vmatpush1.msra.mxu0 0.0
    %304 = vmatprep.subr.mxu0 0.0
    %305 = vmatpush1.msra.mxu0 0.0
    %306 = vmatprep.subr.mxu0 0.0
    %307 = vmatpush1.msra.mxu0 0.0
    %308 = vmatprep.subr.mxu0 0.0
    %309 = vmatpush1.msra.mxu0 0.0
    %310 = vmatprep.subr.mxu0 0.0
    %311 = vmatpush1.msra.mxu0 0.0
    %312 = vmatprep.mubr.f32.mxu0 0.0
    %313 = vmatmul.mubr.f32.gmra.mrb[0].mxu0 %v221
    %v314 = vpop.f32.mrb[0].mxu0
    %v315 = vadd.f32 %v217, %v314
    %v316 = vpop.f32.mrb[0].mxu0
    %317 = vmatprep.mubr.f32.mxu0 0.0
    %318 = vmatmul.mubr.f32.gmra.mrb[0].mxu0 %v224
    %v319 = vpop.f32.mrb[0].mxu0
    %v320 = vadd.f32 %v217, %v319
    %v321 = vpop.f32.mrb[0].mxu0
    %322 = vmatprep.mubr.f32.mxu0 0.0
    %323 = vmatmul.mubr.f32.gmra.mrb[0].mxu0 %v227
    %v324 = vpop.f32.mrb[0].mxu0
    %v325 = vadd.f32 %v217, %v324
    %v326 = vpop.f32.mrb[0].mxu0
    %327 = vmatprep.mubr.f32.mxu0 0.0
    %328 = vmatmul.mubr.f32.gmra.mrb[0].mxu0 %v230
    %v329 = vpop.f32.mrb[0].mxu0
    %v330 = vadd.f32 %v217, %v329
    %v331 = vpop.f32.mrb[0].mxu0
    %332 = vmatprep.mubr.f32.mxu0 0.0
    %333 = vmatmul.mubr.f32.gmra.mrb[0].mxu0 %v233
    %v334 = vpop.f32.mrb[0].mxu0
    %v335 = vadd.f32 %v217, %v334
    %v336 = vpop.f32.mrb[0].mxu0
    %337 = vmatprep.mubr.f32.mxu0 0.0
    %338 = vmatmul.mubr.f32.gmra.mrb[0].mxu0 %v236
    %v339 = vpop.f32.mrb[0].mxu0
    %v340 = vadd.f32 %v217, %v339
    %v341 = vpop.f32.mrb[0].mxu0
    %342 = vmatprep.mubr.f32.mxu0 0.0
    %343 = vmatmul.mubr.f32.gmra.mrb[0].mxu0 %v239
    %v344 = vpop.f32.mrb[0].mxu0
    %v345 = vadd.f32 %v217, %v344
    %v346 = vpop.f32.mrb[0].mxu0
    %347 = vmatprep.mubr.f32.mxu0 0.0
    %348 = vmatmul.mubr.f32.gmra.mrb[0].mxu0 %v242
    %v349 = vpop.f32.mrb[0].mxu0
    %v350 = vadd.f32 %v217, %v349
    %v351 = vpop.f32.mrb[0].mxu0
    %352 = vdwg.mxu0
    %v353 = vlaneseq
    %v354 = vshrl.u32 %v353, 7
    %v355 = vsub.s32 7, %v354
    %v356 = vrot.slane %v315, %v355
    %v357 = vlaneseq
    %v358 = vshrl.u32 %v357, 7
    %v359 = vsub.s32 7, %v358
    %v360 = vrot.slane %v320, %v359
    %v361 = vlaneseq
    %v362 = vshrl.u32 %v361, 7
    %v363 = vsub.s32 7, %v362
    %v364 = vrot.slane %v325, %v363
    %v365 = vlaneseq
    %v366 = vshrl.u32 %v365, 7
    %v367 = vsub.s32 7, %v366
    %v368 = vrot.slane %v330, %v367
    %v369 = vlaneseq
    %v370 = vshrl.u32 %v369, 7
    %v371 = vsub.s32 7, %v370
    %v372 = vrot.slane %v335, %v371
    %v373 = vlaneseq
    %v374 = vshrl.u32 %v373, 7
    %v375 = vsub.s32 7, %v374
    %v376 = vrot.slane %v340, %v375
    %v377 = vlaneseq
    %v378 = vshrl.u32 %v377, 7
    %v379 = vsub.s32 7, %v378
    %v380 = vrot.slane %v345, %v379
    %v381 = vlaneseq
    %v382 = vshrl.u32 %v381, 7
    %v383 = vsub.s32 7, %v382
    %v384 = vrot.slane %v350, %v383
    %393 = vrot.lane.b32.xlu0 %v315, 124
    %v394 = vpop.permute.xlu0 %393
    %395 = vrot.lane.b32.xlu0 %v320, 124
    %v396 = vpop.permute.xlu0 %395
    %397 = vrot.lane.b32.xlu0 %v325, 124
    %v398 = vpop.permute.xlu0 %397
    %399 = vrot.lane.b32.xlu0 %v330, 124
    %v400 = vpop.permute.xlu0 %399
    %401 = vrot.lane.b32.xlu0 %v335, 124
    %v402 = vpop.permute.xlu0 %401
    %403 = vrot.lane.b32.xlu0 %v340, 124
    %v404 = vpop.permute.xlu0 %403
    %405 = vrot.lane.b32.xlu0 %v345, 124
    %v406 = vpop.permute.xlu0 %405
    %407 = vrot.lane.b32.xlu0 %v350, 124
    %v408 = vpop.permute.xlu0 %407
    %v417 = vmul.f32 %v356, %v394
    %v418 = vmul.f32 %v360, %v396
    %v419 = vmul.f32 %v364, %v398
    %v420 = vmul.f32 %v368, %v400
    %v421 = vmul.f32 %v372, %v402
    %v422 = vmul.f32 %v376, %v404
    %v423 = vmul.f32 %v380, %v406
    %v424 = vmul.f32 %v384, %v408
    %v425 = vsel %vm219, %v417, -inf
    %v426 = vrot.slane %v425, 4
    %v427 = vmax.f32 %v425, %v426
    %v428 = vrot.slane %v427, 2
    %v429 = vmax.f32 %v427, %v428
    %v430 = vrot.slane %v429, 1
    %v431 = vmax.f32 %v429, %v430
    %v432 = vsel %vm219, %v418, -inf
    %v433 = vrot.slane %v432, 4
    %v434 = vmax.f32 %v432, %v433
    %v435 = vrot.slane %v434, 2
    %v436 = vmax.f32 %v434, %v435
    %v437 = vrot.slane %v436, 1
    %v438 = vmax.f32 %v436, %v437
    %v439 = vsel %vm219, %v419, -inf
    %v440 = vrot.slane %v439, 4
    %v441 = vmax.f32 %v439, %v440
    %v442 = vrot.slane %v441, 2
    %v443 = vmax.f32 %v441, %v442
    %v444 = vrot.slane %v443, 1
    %v445 = vmax.f32 %v443, %v444
    %v446 = vsel %vm219, %v420, -inf
    %v447 = vrot.slane %v446, 4
    %v448 = vmax.f32 %v446, %v447
    %v449 = vrot.slane %v448, 2
    %v450 = vmax.f32 %v448, %v449
    %v451 = vrot.slane %v450, 1
    %v452 = vmax.f32 %v450, %v451
    %v453 = vsel %vm219, %v421, -inf
    %v454 = vrot.slane %v453, 4
    %v455 = vmax.f32 %v453, %v454
    %v456 = vrot.slane %v455, 2
    %v457 = vmax.f32 %v455, %v456
    %v458 = vrot.slane %v457, 1
    %v459 = vmax.f32 %v457, %v458
    %v460 = vsel %vm219, %v422, -inf
    %v461 = vrot.slane %v460, 4
    %v462 = vmax.f32 %v460, %v461
    %v463 = vrot.slane %v462, 2
    %v464 = vmax.f32 %v462, %v463
    %v465 = vrot.slane %v464, 1
    %v466 = vmax.f32 %v464, %v465
    %v467 = vsel %vm219, %v423, -inf
    %v468 = vrot.slane %v467, 4
    %v469 = vmax.f32 %v467, %v468
    %v470 = vrot.slane %v469, 2
    %v471 = vmax.f32 %v469, %v470
    %v472 = vrot.slane %v471, 1
    %v473 = vmax.f32 %v471, %v472
    %v474 = vsel %vm219, %v424, -inf
    %v475 = vrot.slane %v474, 4
    %v476 = vmax.f32 %v474, %v475
    %v477 = vrot.slane %v476, 2
    %v478 = vmax.f32 %v476, %v477
    %v479 = vrot.slane %v478, 1
    %v480 = vmax.f32 %v478, %v479
    %v481 = vsub.f32 %v417, %v431
    %v482 = vsub.f32 %v418, %v438
    %v483 = vsub.f32 %v419, %v445
    %v484 = vsub.f32 %v420, %v452
    %v485 = vsub.f32 %v421, %v459
    %v486 = vsub.f32 %v422, %v466
    %v487 = vsub.f32 %v423, %v473
    %v488 = vsub.f32 %v424, %v480
    %v489 = vmul.f32 %v481, 1.442695
    %v490 = vpow.pop %v489
    %v491 = vmul.f32 %v482, 1.442695
    %v492 = vpow.pop %v491
    %v493 = vmul.f32 %v483, 1.442695
    %v494 = vpow.pop %v493
    %v495 = vmul.f32 %v484, 1.442695
    %v496 = vpow.pop %v495
    %v497 = vmul.f32 %v485, 1.442695
    %v498 = vpow.pop %v497
    %v499 = vmul.f32 %v486, 1.442695
    %v500 = vpow.pop %v499
    %v501 = vmul.f32 %v487, 1.442695
    %v502 = vpow.pop %v501
    %v503 = vmul.f32 %v488, 1.442695
    %v504 = vpow.pop %v503
    %v505 = vsel %vm219, %v490, 0.0
    %v506 = vrot.slane %v505, 4
    %v507 = vadd.f32 %v505, %v506
    %v508 = vrot.slane %v507, 2
    %v509 = vadd.f32 %v507, %v508
    %v510 = vrot.slane %v509, 1
    %v511 = vadd.f32 %v509, %v510
    %v512 = vsel %vm219, %v492, 0.0
    %v513 = vrot.slane %v512, 4
    %v514 = vadd.f32 %v512, %v513
    %v515 = vrot.slane %v514, 2
    %v516 = vadd.f32 %v514, %v515
    %v517 = vrot.slane %v516, 1
    %v518 = vadd.f32 %v516, %v517
    %v519 = vsel %vm219, %v494, 0.0
    %v520 = vrot.slane %v519, 4
    %v521 = vadd.f32 %v519, %v520
    %v522 = vrot.slane %v521, 2
    %v523 = vadd.f32 %v521, %v522
    %v524 = vrot.slane %v523, 1
    %v525 = vadd.f32 %v523, %v524
    %v526 = vsel %vm219, %v496, 0.0
    %v527 = vrot.slane %v526, 4
    %v528 = vadd.f32 %v526, %v527
    %v529 = vrot.slane %v528, 2
    %v530 = vadd.f32 %v528, %v529
    %v531 = vrot.slane %v530, 1
    %v532 = vadd.f32 %v530, %v531
    %v533 = vsel %vm219, %v498, 0.0
    %v534 = vrot.slane %v533, 4
    %v535 = vadd.f32 %v533, %v534
    %v536 = vrot.slane %v535, 2
    %v537 = vadd.f32 %v535, %v536
    %v538 = vrot.slane %v537, 1
    %v539 = vadd.f32 %v537, %v538
    %v540 = vsel %vm219, %v500, 0.0
    %v541 = vrot.slane %v540, 4
    %v542 = vadd.f32 %v540, %v541
    %v543 = vrot.slane %v542, 2
    %v544 = vadd.f32 %v542, %v543
    %v545 = vrot.slane %v544, 1
    %v546 = vadd.f32 %v544, %v545
    %v547 = vsel %vm219, %v502, 0.0
    %v548 = vrot.slane %v547, 4
    %v549 = vadd.f32 %v547, %v548
    %v550 = vrot.slane %v549, 2
    %v551 = vadd.f32 %v549, %v550
    %v552 = vrot.slane %v551, 1
    %v553 = vadd.f32 %v551, %v552
    %v554 = vsel %vm219, %v504, 0.0
    %v555 = vrot.slane %v554, 4
    %v556 = vadd.f32 %v554, %v555
    %v557 = vrot.slane %v556, 2
    %v558 = vadd.f32 %v556, %v557
    %v559 = vrot.slane %v558, 1
    %v560 = vadd.f32 %v558, %v559
    %561 = vrot.lane.b32.xlu0 %v315, 120
    %v562 = vpop.permute.xlu0 %561
    %563 = vrot.lane.b32.xlu0 %v320, 120
    %v564 = vpop.permute.xlu0 %563
    %565 = vrot.lane.b32.xlu0 %v325, 120
    %v566 = vpop.permute.xlu0 %565
    %567 = vrot.lane.b32.xlu0 %v330, 120
    %v568 = vpop.permute.xlu0 %567
    %569 = vrot.lane.b32.xlu0 %v335, 120
    %v570 = vpop.permute.xlu0 %569
    %571 = vrot.lane.b32.xlu0 %v340, 120
    %v572 = vpop.permute.xlu0 %571
    %573 = vrot.lane.b32.xlu0 %v345, 120
    %v574 = vpop.permute.xlu0 %573
    %575 = vrot.lane.b32.xlu0 %v350, 120
    %v576 = vpop.permute.xlu0 %575
    %v585 = vmul.f32 %v490, %v562
    %v586 = vmul.f32 %v492, %v564
    %v587 = vmul.f32 %v494, %v566
    %v588 = vmul.f32 %v496, %v568
    %v589 = vmul.f32 %v498, %v570
    %v590 = vmul.f32 %v500, %v572
    %v591 = vmul.f32 %v502, %v574
    %v592 = vmul.f32 %v504, %v576
    %v593 = vsel %vm219, %v585, 0.0
    %v594 = vrot.slane %v593, 4
    %v595 = vadd.f32 %v593, %v594
    %v596 = vrot.slane %v595, 2
    %v597 = vadd.f32 %v595, %v596
    %v598 = vrot.slane %v597, 1
    %v599 = vadd.f32 %v597, %v598
    %v600 = vsel %vm219, %v586, 0.0
    %v601 = vrot.slane %v600, 4
    %v602 = vadd.f32 %v600, %v601
    %v603 = vrot.slane %v602, 2
    %v604 = vadd.f32 %v602, %v603
    %v605 = vrot.slane %v604, 1
    %v606 = vadd.f32 %v604, %v605
    %v607 = vsel %vm219, %v587, 0.0
    %v608 = vrot.slane %v607, 4
    %v609 = vadd.f32 %v607, %v608
    %v610 = vrot.slane %v609, 2
    %v611 = vadd.f32 %v609, %v610
    %v612 = vrot.slane %v611, 1
    %v613 = vadd.f32 %v611, %v612
    %v614 = vsel %vm219, %v588, 0.0
    %v615 = vrot.slane %v614, 4
    %v616 = vadd.f32 %v614, %v615
    %v617 = vrot.slane %v616, 2
    %v618 = vadd.f32 %v616, %v617
    %v619 = vrot.slane %v618, 1
    %v620 = vadd.f32 %v618, %v619
    %v621 = vsel %vm219, %v589, 0.0
    %v622 = vrot.slane %v621, 4
    %v623 = vadd.f32 %v621, %v622
    %v624 = vrot.slane %v623, 2
    %v625 = vadd.f32 %v623, %v624
    %v626 = vrot.slane %v625, 1
    %v627 = vadd.f32 %v625, %v626
    %v628 = vsel %vm219, %v590, 0.0
    %v629 = vrot.slane %v628, 4
    %v630 = vadd.f32 %v628, %v629
    %v631 = vrot.slane %v630, 2
    %v632 = vadd.f32 %v630, %v631
    %v633 = vrot.slane %v632, 1
    %v634 = vadd.f32 %v632, %v633
    %v635 = vsel %vm219, %v591, 0.0
    %v636 = vrot.slane %v635, 4
    %v637 = vadd.f32 %v635, %v636
    %v638 = vrot.slane %v637, 2
    %v639 = vadd.f32 %v637, %v638
    %v640 = vrot.slane %v639, 1
    %v641 = vadd.f32 %v639, %v640
    %v642 = vsel %vm219, %v592, 0.0
    %v643 = vrot.slane %v642, 4
    %v644 = vadd.f32 %v642, %v643
    %v645 = vrot.slane %v644, 2
    %v646 = vadd.f32 %v644, %v645
    %v647 = vrot.slane %v646, 1
    %v648 = vadd.f32 %v646, %v647
    %v649 = vrcp.pop %v511
    %v650 = vrcp.pop %v518
    %v651 = vrcp.pop %v525
    %v652 = vrcp.pop %v532
    %v653 = vrcp.pop %v539
    %v654 = vrcp.pop %v546
    %v655 = vrcp.pop %v553
    %v656 = vrcp.pop %v560
    %v657 = vmul.f32 %v599, %v649
    %v658 = vmul.f32 %v606, %v650
    %v659 = vmul.f32 %v613, %v651
    %v660 = vmul.f32 %v620, %v652
    %v661 = vmul.f32 %v627, %v653
    %v662 = vmul.f32 %v634, %v654
    %v663 = vmul.f32 %v641, %v655
    %v664 = vmul.f32 %v648, %v656
    %v665 = vld [vmem:[%s5] sm:$0xf]
    %v666 = vld [vmem:[%s6] sm:$0x1]
    %v668 = vlaneseq
    %v669 = vshrl.u32 %v668, 7
    %v670 = vsub.s32 0, %v669
    %v671 = vrot.slane %v666, %v670
    %vm681 = vcmask 1041409
    %v682 = vsel %vm681, %v658, %v657
    %vm683 = vcmask 1042434
    %v684 = vsel %vm683, %v659, %v682
    %vm685 = vcmask 1043459
    %v686 = vsel %vm685, %v660, %v684
    %vm687 = vcmask 1044484
    %v688 = vsel %vm687, %v661, %v686
    %vm689 = vcmask 1045509
    %v690 = vsel %vm689, %v662, %v688
    %vm691 = vcmask 1046534
    %v692 = vsel %vm691, %v663, %v690
    %vm693 = vcmask 1047559
    %v694 = vsel %vm693, %v664, %v692
    %v695 = vsel %vm219, %v694, 0
    %v698 = vsel %vm244, %v665, 0
    %700 = vmatprep.subr.mxu0 0.0
    %701 = vmatpush1.msra.mxu0 %v698
    %702 = vmatprep.subr.mxu0 0.0
    %703 = vmatpush1.msra.mxu0 0.0
    %704 = vmatprep.subr.mxu0 0.0
    %705 = vmatpush1.msra.mxu0 0.0
    %706 = vmatprep.subr.mxu0 0.0
    %707 = vmatpush1.msra.mxu0 0.0
    %708 = vmatprep.subr.mxu0 0.0
    %709 = vmatpush1.msra.mxu0 0.0
    %710 = vmatprep.subr.mxu0 0.0
    %711 = vmatpush1.msra.mxu0 0.0
    %712 = vmatprep.subr.mxu0 0.0
    %713 = vmatpush1.msra.mxu0 0.0
    %714 = vmatprep.subr.mxu0 0.0
    %715 = vmatpush1.msra.mxu0 0.0
    %716 = vmatprep.subr.mxu0 0.0
    %717 = vmatpush1.msra.mxu0 0.0
    %718 = vmatprep.subr.mxu0 0.0
    %719 = vmatpush1.msra.mxu0 0.0
    %720 = vmatprep.subr.mxu0 0.0
    %721 = vmatpush1.msra.mxu0 0.0
    %722 = vmatprep.subr.mxu0 0.0
    %723 = vmatpush1.msra.mxu0 0.0
    %724 = vmatprep.subr.mxu0 0.0
    %725 = vmatpush1.msra.mxu0 0.0
    %726 = vmatprep.subr.mxu0 0.0
    %727 = vmatpush1.msra.mxu0 0.0
    %728 = vmatprep.subr.mxu0 0.0
    %729 = vmatpush1.msra.mxu0 0.0
    %730 = vmatprep.subr.mxu0 0.0
    %731 = vmatpush1.msra.mxu0 0.0
    %732 = vmatprep.subr.mxu0 0.0
    %733 = vmatpush1.msra.mxu0 0.0
    %734 = vmatprep.subr.mxu0 0.0
    %735 = vmatpush1.msra.mxu0 0.0
    %736 = vmatprep.subr.mxu0 0.0
    %737 = vmatpush1.msra.mxu0 0.0
    %738 = vmatprep.subr.mxu0 0.0
    %739 = vmatpush1.msra.mxu0 0.0
    %740 = vmatprep.subr.mxu0 0.0
    %741 = vmatpush1.msra.mxu0 0.0
    %742 = vmatprep.subr.mxu0 0.0
    %743 = vmatpush1.msra.mxu0 0.0
    %744 = vmatprep.subr.mxu0 0.0
    %745 = vmatpush1.msra.mxu0 0.0
    %746 = vmatprep.subr.mxu0 0.0
    %747 = vmatpush1.msra.mxu0 0.0
    %748 = vmatprep.subr.mxu0 0.0
    %749 = vmatpush1.msra.mxu0 0.0
    %750 = vmatprep.subr.mxu0 0.0
    %751 = vmatpush1.msra.mxu0 0.0
    %752 = vmatprep.subr.mxu0 0.0
    %753 = vmatpush1.msra.mxu0 0.0
    %754 = vmatprep.subr.mxu0 0.0
    %755 = vmatpush1.msra.mxu0 0.0
    %756 = vmatprep.subr.mxu0 0.0
    %757 = vmatpush1.msra.mxu0 0.0
    %758 = vmatprep.subr.mxu0 0.0
    %759 = vmatpush1.msra.mxu0 0.0
    %760 = vmatprep.subr.mxu0 0.0
    %761 = vmatpush1.msra.mxu0 0.0
    %762 = vmatprep.subr.mxu0 0.0
    %763 = vmatpush1.msra.mxu0 0.0
    %764 = vmatprep.mubr.f32.mxu0 0.0
    %765 = vmatmul.mubr.f32.gmra.mrb[0].mxu0 %v695
    %v766 = vpop.f32.mrb[0].mxu0
    %v767 = vadd.f32 %v671, %v766
    %v768 = vpop.f32.mrb[0].mxu0
    %769 = vdwg.mxu0
    %v771 = vrot.slane %v767, 1
    %v772 = vrot.slane %v767, 2
    %v773 = vrot.slane %v767, 3
    %v774 = vrot.slane %v767, 4
    %v775 = vrot.slane %v767, 5
    %v776 = vrot.slane %v767, 6
    %v777 = vrot.slane %v767, 7
    %v786 = vadd.f32 %v173, %v771
    %v787 = vadd.f32 %v178, %v772
    %v788 = vadd.f32 %v183, %v773
    %v789 = vadd.f32 %v188, %v774
    %v790 = vadd.f32 %v193, %v775
    %v791 = vadd.f32 %v198, %v776
    %v792 = vadd.f32 %v203, %v777
    %v793 = vadd.f32 %v208, %v767
    %v794 = vld [vmem:[%s11] sm:$0x1]
    %v795 = vld [vmem:[%s12] sm:$0x1]
    %v804 = vrot.slane %v787, 7
    %v805 = vrot.slane %v788, 6
    %v806 = vsel %vm681, %v805, %v804
    %v807 = vrot.slane %v789, 5
    %v808 = vsel %vm683, %v807, %v806
    %v809 = vrot.slane %v790, 4
    %v810 = vsel %vm685, %v809, %v808
    %v811 = vrot.slane %v791, 3
    %v812 = vsel %vm687, %v811, %v810
    %v813 = vrot.slane %v792, 2
    %v814 = vsel %vm689, %v813, %v812
    %v815 = vrot.slane %v793, 1
    %v816 = vsel %vm691, %v815, %v814
    %vm819 = vcmask 31751
    %v820 = vsel %vm819, %v786, 0.0
    %821 = vadd.xlane.f32.xlu0 %v820
    %v822 = vpop.xlane.xlu0 %821
    %vm823 = vcmask 30720
    %v824 = vsel %vm823, %v816, 0.0
    %825 = vadd.xlane.f32.xlu0 %v824
    %v826 = vpop.xlane.xlu0 %825
    %v827 = vrcp.pop 4.0
    %v828 = vmul.f32 %v822, %v827
    %v829 = vmul.f32 %v826, %v827
    %v832 = vrot.slane %v829, 1
    %v833 = vrot.slane %v829, 2
    %v834 = vrot.slane %v829, 3
    %v835 = vrot.slane %v829, 4
    %v836 = vrot.slane %v829, 5
    %v837 = vrot.slane %v829, 6
    %v838 = vrot.slane %v829, 7
    %v847 = vsub.f32 %v786, %v828
    %v848 = vsub.f32 %v787, %v832
    %v849 = vsub.f32 %v788, %v833
    %v850 = vsub.f32 %v789, %v834
    %v851 = vsub.f32 %v790, %v835
    %v852 = vsub.f32 %v791, %v836
    %v853 = vsub.f32 %v792, %v837
    %v854 = vsub.f32 %v793, %v838
    %v855 = vmul.f32 %v847, %v847
    %v856 = vmul.f32 %v848, %v848
    %v857 = vmul.f32 %v849, %v849
    %v858 = vmul.f32 %v850, %v850
    %v859 = vmul.f32 %v851, %v851
    %v860 = vmul.f32 %v852, %v852
    %v861 = vmul.f32 %v853, %v853
    %v862 = vmul.f32 %v854, %v854
    %v871 = vrot.slane %v856, 7
    %v872 = vrot.slane %v857, 6
    %v873 = vsel %vm681, %v872, %v871
    %v874 = vrot.slane %v858, 5
    %v875 = vsel %vm683, %v874, %v873
    %v876 = vrot.slane %v859, 4
    %v877 = vsel %vm685, %v876, %v875
    %v878 = vrot.slane %v860, 3
    %v879 = vsel %vm687, %v878, %v877
    %v880 = vrot.slane %v861, 2
    %v881 = vsel %vm689, %v880, %v879
    %v882 = vrot.slane %v862, 1
    %v883 = vsel %vm691, %v882, %v881
    %v886 = vsel %vm819, %v855, 0.0
    %887 = vadd.xlane.f32.xlu0 %v886
    %v888 = vpop.xlane.xlu0 %887
    %v889 = vsel %vm823, %v883, 0.0
    %890 = vadd.xlane.f32.xlu0 %v889
    %v891 = vpop.xlane.xlu0 %890
    %v892 = vmul.f32 %v888, %v827
    %v893 = vmul.f32 %v891, %v827
    %v894 = vadd.f32 %v892, 1e-05
    %v895 = vadd.f32 %v893, 1e-05
    %v896 = vrsqrt.pop %v894
    %v897 = vrsqrt.pop %v895
    %v900 = vrot.slane %v897, 1
    %v901 = vrot.slane %v897, 2
    %v902 = vrot.slane %v897, 3
    %v903 = vrot.slane %v897, 4
    %v904 = vrot.slane %v897, 5
    %v905 = vrot.slane %v897, 6
    %v906 = vrot.slane %v897, 7
    %v915 = vmul.f32 %v847, %v896
    %v916 = vmul.f32 %v848, %v900
    %v917 = vmul.f32 %v849, %v901
    %v918 = vmul.f32 %v850, %v902
    %v919 = vmul.f32 %v851, %v903
    %v920 = vmul.f32 %v852, %v904
    %v921 = vmul.f32 %v853, %v905
    %v922 = vmul.f32 %v854, %v906
    %v924 = vlaneseq
    %v925 = vshrl.u32 %v924, 7
    %v926 = vsub.s32 0, %v925
    %v927 = vrot.slane %v794, %v926
    %v929 = vmul.f32 %v915, %v927
    %v930 = vmul.f32 %v916, %v927
    %v931 = vmul.f32 %v917, %v927
    %v932 = vmul.f32 %v918, %v927
    %v933 = vmul.f32 %v919, %v927
    %v934 = vmul.f32 %v920, %v927
    %v935 = vmul.f32 %v921, %v927
    %v936 = vmul.f32 %v922, %v927
    %v938 = vlaneseq
    %v939 = vshrl.u32 %v938, 7
    %v940 = vsub.s32 0, %v939
    %v941 = vrot.slane %v795, %v940
    %v943 = vadd.f32 %v929, %v941
    %v944 = vadd.f32 %v930, %v941
    %v945 = vadd.f32 %v931, %v941
    %v946 = vadd.f32 %v932, %v941
    %v947 = vadd.f32 %v933, %v941
    %v948 = vadd.f32 %v934, %v941
    %v949 = vadd.f32 %v935, %v941
    %v950 = vadd.f32 %v936, %v941
    %v951 = vpack.c.bf16 %v943, %v943
    %v952 = vpack.c.bf16 %v944, %v944
    %v953 = vpack.c.bf16 %v945, %v945
    %v954 = vpack.c.bf16 %v946, %v946
    %v955 = vpack.c.bf16 %v947, %v947
    %v956 = vpack.c.bf16 %v948, %v948
    %v957 = vpack.c.bf16 %v949, %v949
    %v958 = vpack.c.bf16 %v950, %v950
    %v959 = vld [vmem:[%s7] sm:$0xff]
    %v960 = vld [vmem:[%s7 + $0x8] sm:$0xff]
    %v961 = vld [vmem:[%s7 + $0x10] sm:$0xff]
    %v962 = vld [vmem:[%s7 + $0x18] sm:$0xff]
    %v963 = vld [vmem:[%s8] sm:$0xff]
    %v964 = vld [vmem:[%s8 + $0x8] sm:$0xff]
    %v967 = vlaneseq
    %v968 = vshrl.u32 %v967, 7
    %v969 = vsub.s32 0, %v968
    %v970 = vrot.slane %v963, %v969
    %v971 = vlaneseq
    %v972 = vshrl.u32 %v971, 7
    %v973 = vsub.s32 1, %v972
    %v974 = vrot.slane %v963, %v973
    %v975 = vlaneseq
    %v976 = vshrl.u32 %v975, 7
    %v977 = vsub.s32 2, %v976
    %v978 = vrot.slane %v963, %v977
    %v979 = vlaneseq
    %v980 = vshrl.u32 %v979, 7
    %v981 = vsub.s32 3, %v980
    %v982 = vrot.slane %v963, %v981
    %v983 = vlaneseq
    %v984 = vshrl.u32 %v983, 7
    %v985 = vsub.s32 4, %v984
    %v986 = vrot.slane %v963, %v985
    %v987 = vlaneseq
    %v988 = vshrl.u32 %v987, 7
    %v989 = vsub.s32 5, %v988
    %v990 = vrot.slane %v963, %v989
    %v991 = vlaneseq
    %v992 = vshrl.u32 %v991, 7
    %v993 = vsub.s32 6, %v992
    %v994 = vrot.slane %v963, %v993
    %v995 = vlaneseq
    %v996 = vshrl.u32 %v995, 7
    %v997 = vsub.s32 7, %v996
    %v998 = vrot.slane %v963, %v997
    %v999 = vlaneseq
    %v1000 = vshrl.u32 %v999, 7
    %v1001 = vsub.s32 0, %v1000
    %v1002 = vrot.slane %v964, %v1001
    %v1003 = vlaneseq
    %v1004 = vshrl.u32 %v1003, 7
    %v1005 = vsub.s32 1, %v1004
    %v1006 = vrot.slane %v964, %v1005
    %v1007 = vlaneseq
    %v1008 = vshrl.u32 %v1007, 7
    %v1009 = vsub.s32 2, %v1008
    %v1010 = vrot.slane %v964, %v1009
    %v1011 = vlaneseq
    %v1012 = vshrl.u32 %v1011, 7
    %v1013 = vsub.s32 3, %v1012
    %v1014 = vrot.slane %v964, %v1013
    %v1015 = vlaneseq
    %v1016 = vshrl.u32 %v1015, 7
    %v1017 = vsub.s32 4, %v1016
    %v1018 = vrot.slane %v964, %v1017
    %v1019 = vlaneseq
    %v1020 = vshrl.u32 %v1019, 7
    %v1021 = vsub.s32 5, %v1020
    %v1022 = vrot.slane %v964, %v1021
    %v1023 = vlaneseq
    %v1024 = vshrl.u32 %v1023, 7
    %v1025 = vsub.s32 6, %v1024
    %v1026 = vrot.slane %v964, %v1025
    %v1027 = vlaneseq
    %v1028 = vshrl.u32 %v1027, 7
    %v1029 = vsub.s32 7, %v1028
    %v1030 = vrot.slane %v964, %v1029
    %v1055 = vunpack.c.l.b16 %v951
    %v1056 = vunpack.c.l.b16 %v952
    %v1057 = vunpack.c.l.b16 %v953
    %v1058 = vunpack.c.l.b16 %v954
    %v1059 = vunpack.c.l.b16 %v955
    %v1060 = vunpack.c.l.b16 %v956
    %v1061 = vunpack.c.l.b16 %v957
    %v1062 = vunpack.c.l.b16 %v958
    %v1063 = vrot.slane %v1055, 7
    %v1064 = vrot.slane %v1056, 6
    %v1065 = vsel %vm681, %v1064, %v1063
    %v1066 = vrot.slane %v1057, 5
    %v1067 = vsel %vm683, %v1066, %v1065
    %v1068 = vrot.slane %v1058, 4
    %v1069 = vsel %vm685, %v1068, %v1067
    %v1070 = vrot.slane %v1059, 3
    %v1071 = vsel %vm687, %v1070, %v1069
    %v1072 = vrot.slane %v1060, 2
    %v1073 = vsel %vm689, %v1072, %v1071
    %v1074 = vrot.slane %v1061, 1
    %v1075 = vsel %vm691, %v1074, %v1073
    %v1076 = vsel %vm693, %v1062, %v1075
    %v1077 = vpack.c.b16 %v1076, %v1076
    %v1082 = vcombine.high %v959, %v959
    %v1084 = vunpack.c.l.s4 1983009808
    %v1085 = vunpack.c.0.s8 %v1084
    %v1086 = vlaneseq
    %v1087 = vshrl.u32 %v1086, 7
    %v1088 = vsub.s32 %v1085, %v1087
    %v1089 = vrot.slane %v959, %v1088
    %v1091 = vunpack.c.l.s4 1983009808
    %v1092 = vunpack.c.0.s8 %v1091
    %v1093 = vlaneseq
    %v1094 = vshrl.u32 %v1093, 7
    %v1095 = vsub.s32 %v1092, %v1094
    %v1096 = vrot.slane %v1082, %v1095
    %v1097 = vcombine.high %v1089, %v1089
    %v1098 = vcombine.high %v1096, %v1096
    %v1099 = vcombine.high %v960, %v960
    %v1101 = vunpack.c.l.s4 1983009808
    %v1102 = vunpack.c.0.s8 %v1101
    %v1103 = vlaneseq
    %v1104 = vshrl.u32 %v1103, 7
    %v1105 = vsub.s32 %v1102, %v1104
    %v1106 = vrot.slane %v960, %v1105
    %v1108 = vunpack.c.l.s4 1983009808
    %v1109 = vunpack.c.0.s8 %v1108
    %v1110 = vlaneseq
    %v1111 = vshrl.u32 %v1110, 7
    %v1112 = vsub.s32 %v1109, %v1111
    %v1113 = vrot.slane %v1099, %v1112
    %v1114 = vcombine.high %v1106, %v1106
    %v1115 = vcombine.high %v1113, %v1113
    %v1116 = vcombine.high %v961, %v961
    %v1118 = vunpack.c.l.s4 1983009808
    %v1119 = vunpack.c.0.s8 %v1118
    %v1120 = vlaneseq
    %v1121 = vshrl.u32 %v1120, 7
    %v1122 = vsub.s32 %v1119, %v1121
    %v1123 = vrot.slane %v961, %v1122
    %v1125 = vunpack.c.l.s4 1983009808
    %v1126 = vunpack.c.0.s8 %v1125
    %v1127 = vlaneseq
    %v1128 = vshrl.u32 %v1127, 7
    %v1129 = vsub.s32 %v1126, %v1128
    %v1130 = vrot.slane %v1116, %v1129
    %v1131 = vcombine.high %v1123, %v1123
    %v1132 = vcombine.high %v1130, %v1130
    %v1133 = vcombine.high %v962, %v962
    %v1135 = vunpack.c.l.s4 1983009808
    %v1136 = vunpack.c.0.s8 %v1135
    %v1137 = vlaneseq
    %v1138 = vshrl.u32 %v1137, 7
    %v1139 = vsub.s32 %v1136, %v1138
    %v1140 = vrot.slane %v962, %v1139
    %v1142 = vunpack.c.l.s4 1983009808
    %v1143 = vunpack.c.0.s8 %v1142
    %v1144 = vlaneseq
    %v1145 = vshrl.u32 %v1144, 7
    %v1146 = vsub.s32 %v1143, %v1145
    %v1147 = vrot.slane %v1133, %v1146
    %v1148 = vcombine.high %v1140, %v1140
    %v1149 = vcombine.high %v1147, %v1147
    %v1151 = vsel %vm219, %v1077, 0
    %vm1153 = vcmask 1041408
    %v1155 = vsel %vm1153, %v1089, 0
    %v1158 = vsel %vm1153, %v1097, 0
    %v1161 = vsel %vm1153, %v1096, 0
    %v1164 = vsel %vm1153, %v1098, 0
    %v1167 = vsel %vm1153, %v1106, 0
    %v1170 = vsel %vm1153, %v1114, 0
    %v1173 = vsel %vm1153, %v1113, 0
    %v1176 = vsel %vm1153, %v1115, 0
    %v1179 = vsel %vm1153, %v1123, 0
    %v1182 = vsel %vm1153, %v1131, 0
    %v1185 = vsel %vm1153, %v1130, 0
    %v1188 = vsel %vm1153, %v1132, 0
    %v1191 = vsel %vm1153, %v1140, 0
    %v1194 = vsel %vm1153, %v1148, 0
    %v1197 = vsel %vm1153, %v1147, 0
    %v1200 = vsel %vm1153, %v1149, 0
    %1202 = vmatprep.subr.bf16.mxu0 %v1158
    %1203 = vmatpush1.bf16.msra.mxu0 %v1155
    %1204 = vmatprep.subr.bf16.mxu0 0
    %1205 = vmatpush1.bf16.msra.mxu0 0
    %1206 = vmatprep.subr.bf16.mxu0 0
    %1207 = vmatpush1.bf16.msra.mxu0 0
    %1208 = vmatprep.subr.bf16.mxu0 0
    %1209 = vmatpush1.bf16.msra.mxu0 0
    %1210 = vmatprep.subr.bf16.mxu0 0
    %1211 = vmatpush1.bf16.msra.mxu0 0
    %1212 = vmatprep.subr.bf16.mxu0 0
    %1213 = vmatpush1.bf16.msra.mxu0 0
    %1214 = vmatprep.subr.bf16.mxu0 0
    %1215 = vmatpush1.bf16.msra.mxu0 0
    %1216 = vmatprep.subr.bf16.mxu0 0
    %1217 = vmatpush1.bf16.msra.mxu0 0
    %1218 = vmatprep.subr.bf16.mxu0 0
    %1219 = vmatpush1.bf16.msra.mxu0 0
    %1220 = vmatprep.subr.bf16.mxu0 0
    %1221 = vmatpush1.bf16.msra.mxu0 0
    %1222 = vmatprep.subr.bf16.mxu0 0
    %1223 = vmatpush1.bf16.msra.mxu0 0
    %1224 = vmatprep.subr.bf16.mxu0 0
    %1225 = vmatpush1.bf16.msra.mxu0 0
    %1226 = vmatprep.subr.bf16.mxu0 0
    %1227 = vmatpush1.bf16.msra.mxu0 0
    %1228 = vmatprep.subr.bf16.mxu0 0
    %1229 = vmatpush1.bf16.msra.mxu0 0
    %1230 = vmatprep.subr.bf16.mxu0 0
    %1231 = vmatpush1.bf16.msra.mxu0 0
    %1232 = vmatprep.subr.bf16.mxu0 0
    %1233 = vmatpush1.bf16.msra.mxu0 0
    %1234 = vmatprep.mubr.bf16.mxu0 0
    %1235 = vmatmul.mubr.bf16.gmra.mrb[0].mxu0 %v1151
    %v1236 = vpop.f32.mrb[0].mxu0
    %v1237 = vadd.f32 %v970, %v1236
    %v1238 = vpop.f32.mrb[0].mxu0
    %v1239 = vadd.f32 %v974, %v1238
    %v1240 = vpop.f32.mrb[0].mxu0
    %v1241 = vpop.f32.mrb[0].mxu0
    %1242 = vdwg.mxu0
    %1243 = vmatprep.subr.bf16.mxu0 %v1164
    %1244 = vmatpush1.bf16.msra.mxu0 %v1161
    %1245 = vmatprep.subr.bf16.mxu0 0
    %1246 = vmatpush1.bf16.msra.mxu0 0
    %1247 = vmatprep.subr.bf16.mxu0 0
    %1248 = vmatpush1.bf16.msra.mxu0 0
    %1249 = vmatprep.subr.bf16.mxu0 0
    %1250 = vmatpush1.bf16.msra.mxu0 0
    %1251 = vmatprep.subr.bf16.mxu0 0
    %1252 = vmatpush1.bf16.msra.mxu0 0
    %1253 = vmatprep.subr.bf16.mxu0 0
    %1254 = vmatpush1.bf16.msra.mxu0 0
    %1255 = vmatprep.subr.bf16.mxu0 0
    %1256 = vmatpush1.bf16.msra.mxu0 0
    %1257 = vmatprep.subr.bf16.mxu0 0
    %1258 = vmatpush1.bf16.msra.mxu0 0
    %1259 = vmatprep.subr.bf16.mxu0 0
    %1260 = vmatpush1.bf16.msra.mxu0 0
    %1261 = vmatprep.subr.bf16.mxu0 0
    %1262 = vmatpush1.bf16.msra.mxu0 0
    %1263 = vmatprep.subr.bf16.mxu0 0
    %1264 = vmatpush1.bf16.msra.mxu0 0
    %1265 = vmatprep.subr.bf16.mxu0 0
    %1266 = vmatpush1.bf16.msra.mxu0 0
    %1267 = vmatprep.subr.bf16.mxu0 0
    %1268 = vmatpush1.bf16.msra.mxu0 0
    %1269 = vmatprep.subr.bf16.mxu0 0
    %1270 = vmatpush1.bf16.msra.mxu0 0
    %1271 = vmatprep.subr.bf16.mxu0 0
    %1272 = vmatpush1.bf16.msra.mxu0 0
    %1273 = vmatprep.subr.bf16.mxu0 0
    %1274 = vmatpush1.bf16.msra.mxu0 0
    %1275 = vmatprep.mubr.bf16.mxu0 0
    %1276 = vmatmul.mubr.bf16.gmra.mrb[0].mxu0 %v1151
    %v1277 = vpop.f32.mrb[0].mxu0
    %v1278 = vadd.f32 %v978, %v1277
    %v1279 = vpop.f32.mrb[0].mxu0
    %v1280 = vadd.f32 %v982, %v1279
    %v1281 = vpop.f32.mrb[0].mxu0
    %v1282 = vpop.f32.mrb[0].mxu0
    %1283 = vdwg.mxu0
    %1284 = vmatprep.subr.bf16.mxu0 %v1170
    %1285 = vmatpush1.bf16.msra.mxu0 %v1167
    %1286 = vmatprep.subr.bf16.mxu0 0
    %1287 = vmatpush1.bf16.msra.mxu0 0
    %1288 = vmatprep.subr.bf16.mxu0 0
    %1289 = vmatpush1.bf16.msra.mxu0 0
    %1290 = vmatprep.subr.bf16.mxu0 0
    %1291 = vmatpush1.bf16.msra.mxu0 0
    %1292 = vmatprep.subr.bf16.mxu0 0
    %1293 = vmatpush1.bf16.msra.mxu0 0
    %1294 = vmatprep.subr.bf16.mxu0 0
    %1295 = vmatpush1.bf16.msra.mxu0 0
    %1296 = vmatprep.subr.bf16.mxu0 0
    %1297 = vmatpush1.bf16.msra.mxu0 0
    %1298 = vmatprep.subr.bf16.mxu0 0
    %1299 = vmatpush1.bf16.msra.mxu0 0
    %1300 = vmatprep.subr.bf16.mxu0 0
    %1301 = vmatpush1.bf16.msra.mxu0 0
    %1302 = vmatprep.subr.bf16.mxu0 0
    %1303 = vmatpush1.bf16.msra.mxu0 0
    %1304 = vmatprep.subr.bf16.mxu0 0
    %1305 = vmatpush1.bf16.msra.mxu0 0
    %1306 = vmatprep.subr.bf16.mxu0 0
    %1307 = vmatpush1.bf16.msra.mxu0 0
    %1308 = vmatprep.subr.bf16.mxu0 0
    %1309 = vmatpush1.bf16.msra.mxu0 0
    %1310 = vmatprep.subr.bf16.mxu0 0
    %1311 = vmatpush1.bf16.msra.mxu0 0
    %1312 = vmatprep.subr.bf16.mxu0 0
    %1313 = vmatpush1.bf16.msra.mxu0 0
    %1314 = vmatprep.subr.bf16.mxu0 0
    %1315 = vmatpush1.bf16.msra.mxu0 0
    %1316 = vmatprep.mubr.bf16.mxu0 0
    %1317 = vmatmul.mubr.bf16.gmra.mrb[0].mxu0 %v1151
    %v1318 = vpop.f32.mrb[0].mxu0
    %v1319 = vadd.f32 %v986, %v1318
    %v1320 = vpop.f32.mrb[0].mxu0
    %v1321 = vadd.f32 %v990, %v1320
    %v1322 = vpop.f32.mrb[0].mxu0
    %v1323 = vpop.f32.mrb[0].mxu0
    %1324 = vdwg.mxu0
    %1325 = vmatprep.subr.bf16.mxu0 %v1176
    %1326 = vmatpush1.bf16.msra.mxu0 %v1173
    %1327 = vmatprep.subr.bf16.mxu0 0
    %1328 = vmatpush1.bf16.msra.mxu0 0
    %1329 = vmatprep.subr.bf16.mxu0 0
    %1330 = vmatpush1.bf16.msra.mxu0 0
    %1331 = vmatprep.subr.bf16.mxu0 0
    %1332 = vmatpush1.bf16.msra.mxu0 0
    %1333 = vmatprep.subr.bf16.mxu0 0
    %1334 = vmatpush1.bf16.msra.mxu0 0
    %1335 = vmatprep.subr.bf16.mxu0 0
    %1336 = vmatpush1.bf16.msra.mxu0 0
    %1337 = vmatprep.subr.bf16.mxu0 0
    %1338 = vmatpush1.bf16.msra.mxu0 0
    %1339 = vmatprep.subr.bf16.mxu0 0
    %1340 = vmatpush1.bf16.msra.mxu0 0
    %1341 = vmatprep.subr.bf16.mxu0 0
    %1342 = vmatpush1.bf16.msra.mxu0 0
    %1343 = vmatprep.subr.bf16.mxu0 0
    %1344 = vmatpush1.bf16.msra.mxu0 0
    %1345 = vmatprep.subr.bf16.mxu0 0
    %1346 = vmatpush1.bf16.msra.mxu0 0
    %1347 = vmatprep.subr.bf16.mxu0 0
    %1348 = vmatpush1.bf16.msra.mxu0 0
    %1349 = vmatprep.subr.bf16.mxu0 0
    %1350 = vmatpush1.bf16.msra.mxu0 0
    %1351 = vmatprep.subr.bf16.mxu0 0
    %1352 = vmatpush1.bf16.msra.mxu0 0
    %1353 = vmatprep.subr.bf16.mxu0 0
    %1354 = vmatpush1.bf16.msra.mxu0 0
    %1355 = vmatprep.subr.bf16.mxu0 0
    %1356 = vmatpush1.bf16.msra.mxu0 0
    %1357 = vmatprep.mubr.bf16.mxu0 0
    %1358 = vmatmul.mubr.bf16.gmra.mrb[0].mxu0 %v1151
    %v1359 = vpop.f32.mrb[0].mxu0
    %v1360 = vadd.f32 %v994, %v1359
    %v1361 = vpop.f32.mrb[0].mxu0
    %v1362 = vadd.f32 %v998, %v1361
    %v1363 = vpop.f32.mrb[0].mxu0
    %v1364 = vpop.f32.mrb[0].mxu0
    %1365 = vdwg.mxu0
    %1366 = vmatprep.subr.bf16.mxu0 %v1182
    %1367 = vmatpush1.bf16.msra.mxu0 %v1179
    %1368 = vmatprep.subr.bf16.mxu0 0
    %1369 = vmatpush1.bf16.msra.mxu0 0
    %1370 = vmatprep.subr.bf16.mxu0 0
    %1371 = vmatpush1.bf16.msra.mxu0 0
    %1372 = vmatprep.subr.bf16.mxu0 0
    %1373 = vmatpush1.bf16.msra.mxu0 0
    %1374 = vmatprep.subr.bf16.mxu0 0
    %1375 = vmatpush1.bf16.msra.mxu0 0
    %1376 = vmatprep.subr.bf16.mxu0 0
    %1377 = vmatpush1.bf16.msra.mxu0 0
    %1378 = vmatprep.subr.bf16.mxu0 0
    %1379 = vmatpush1.bf16.msra.mxu0 0
    %1380 = vmatprep.subr.bf16.mxu0 0
    %1381 = vmatpush1.bf16.msra.mxu0 0
    %1382 = vmatprep.subr.bf16.mxu0 0
    %1383 = vmatpush1.bf16.msra.mxu0 0
    %1384 = vmatprep.subr.bf16.mxu0 0
    %1385 = vmatpush1.bf16.msra.mxu0 0
    %1386 = vmatprep.subr.bf16.mxu0 0
    %1387 = vmatpush1.bf16.msra.mxu0 0
    %1388 = vmatprep.subr.bf16.mxu0 0
    %1389 = vmatpush1.bf16.msra.mxu0 0
    %1390 = vmatprep.subr.bf16.mxu0 0
    %1391 = vmatpush1.bf16.msra.mxu0 0
    %1392 = vmatprep.subr.bf16.mxu0 0
    %1393 = vmatpush1.bf16.msra.mxu0 0
    %1394 = vmatprep.subr.bf16.mxu0 0
    %1395 = vmatpush1.bf16.msra.mxu0 0
    %1396 = vmatprep.subr.bf16.mxu0 0
    %1397 = vmatpush1.bf16.msra.mxu0 0
    %1398 = vmatprep.mubr.bf16.mxu0 0
    %1399 = vmatmul.mubr.bf16.gmra.mrb[0].mxu0 %v1151
    %v1400 = vpop.f32.mrb[0].mxu0
    %v1401 = vadd.f32 %v1002, %v1400
    %v1402 = vpop.f32.mrb[0].mxu0
    %v1403 = vadd.f32 %v1006, %v1402
    %v1404 = vpop.f32.mrb[0].mxu0
    %v1405 = vpop.f32.mrb[0].mxu0
    %1406 = vdwg.mxu0
    %1407 = vmatprep.subr.bf16.mxu0 %v1188
    %1408 = vmatpush1.bf16.msra.mxu0 %v1185
    %1409 = vmatprep.subr.bf16.mxu0 0
    %1410 = vmatpush1.bf16.msra.mxu0 0
    %1411 = vmatprep.subr.bf16.mxu0 0
    %1412 = vmatpush1.bf16.msra.mxu0 0
    %1413 = vmatprep.subr.bf16.mxu0 0
    %1414 = vmatpush1.bf16.msra.mxu0 0
    %1415 = vmatprep.subr.bf16.mxu0 0
    %1416 = vmatpush1.bf16.msra.mxu0 0
    %1417 = vmatprep.subr.bf16.mxu0 0
    %1418 = vmatpush1.bf16.msra.mxu0 0
    %1419 = vmatprep.subr.bf16.mxu0 0
    %1420 = vmatpush1.bf16.msra.mxu0 0
    %1421 = vmatprep.subr.bf16.mxu0 0
    %1422 = vmatpush1.bf16.msra.mxu0 0
    %1423 = vmatprep.subr.bf16.mxu0 0
    %1424 = vmatpush1.bf16.msra.mxu0 0
    %1425 = vmatprep.subr.bf16.mxu0 0
    %1426 = vmatpush1.bf16.msra.mxu0 0
    %1427 = vmatprep.subr.bf16.mxu0 0
    %1428 = vmatpush1.bf16.msra.mxu0 0
    %1429 = vmatprep.subr.bf16.mxu0 0
    %1430 = vmatpush1.bf16.msra.mxu0 0
    %1431 = vmatprep.subr.bf16.mxu0 0
    %1432 = vmatpush1.bf16.msra.mxu0 0
    %1433 = vmatprep.subr.bf16.mxu0 0
    %1434 = vmatpush1.bf16.msra.mxu0 0
    %1435 = vmatprep.subr.bf16.mxu0 0
    %1436 = vmatpush1.bf16.msra.mxu0 0
    %1437 = vmatprep.subr.bf16.mxu0 0
    %1438 = vmatpush1.bf16.msra.mxu0 0
    %1439 = vmatprep.mubr.bf16.mxu0 0
    %1440 = vmatmul.mubr.bf16.gmra.mrb[0].mxu0 %v1151
    %v1441 = vpop.f32.mrb[0].mxu0
    %v1442 = vadd.f32 %v1010, %v1441
    %v1443 = vpop.f32.mrb[0].mxu0
    %v1444 = vadd.f32 %v1014, %v1443
    %v1445 = vpop.f32.mrb[0].mxu0
    %v1446 = vpop.f32.mrb[0].mxu0
    %1447 = vdwg.mxu0
    %1448 = vmatprep.subr.bf16.mxu0 %v1194
    %1449 = vmatpush1.bf16.msra.mxu0 %v1191
    %1450 = vmatprep.subr.bf16.mxu0 0
    %1451 = vmatpush1.bf16.msra.mxu0 0
    %1452 = vmatprep.subr.bf16.mxu0 0
    %1453 = vmatpush1.bf16.msra.mxu0 0
    %1454 = vmatprep.subr.bf16.mxu0 0
    %1455 = vmatpush1.bf16.msra.mxu0 0
    %1456 = vmatprep.subr.bf16.mxu0 0
    %1457 = vmatpush1.bf16.msra.mxu0 0
    %1458 = vmatprep.subr.bf16.mxu0 0
    %1459 = vmatpush1.bf16.msra.mxu0 0
    %1460 = vmatprep.subr.bf16.mxu0 0
    %1461 = vmatpush1.bf16.msra.mxu0 0
    %1462 = vmatprep.subr.bf16.mxu0 0
    %1463 = vmatpush1.bf16.msra.mxu0 0
    %1464 = vmatprep.subr.bf16.mxu0 0
    %1465 = vmatpush1.bf16.msra.mxu0 0
    %1466 = vmatprep.subr.bf16.mxu0 0
    %1467 = vmatpush1.bf16.msra.mxu0 0
    %1468 = vmatprep.subr.bf16.mxu0 0
    %1469 = vmatpush1.bf16.msra.mxu0 0
    %1470 = vmatprep.subr.bf16.mxu0 0
    %1471 = vmatpush1.bf16.msra.mxu0 0
    %1472 = vmatprep.subr.bf16.mxu0 0
    %1473 = vmatpush1.bf16.msra.mxu0 0
    %1474 = vmatprep.subr.bf16.mxu0 0
    %1475 = vmatpush1.bf16.msra.mxu0 0
    %1476 = vmatprep.subr.bf16.mxu0 0
    %1477 = vmatpush1.bf16.msra.mxu0 0
    %1478 = vmatprep.subr.bf16.mxu0 0
    %1479 = vmatpush1.bf16.msra.mxu0 0
    %1480 = vmatprep.mubr.bf16.mxu0 0
    %1481 = vmatmul.mubr.bf16.gmra.mrb[0].mxu0 %v1151
    %v1482 = vpop.f32.mrb[0].mxu0
    %v1483 = vadd.f32 %v1018, %v1482
    %v1484 = vpop.f32.mrb[0].mxu0
    %v1485 = vadd.f32 %v1022, %v1484
    %v1486 = vpop.f32.mrb[0].mxu0
    %v1487 = vpop.f32.mrb[0].mxu0
    %1488 = vdwg.mxu0
    %1489 = vmatprep.subr.bf16.mxu0 %v1200
    %1490 = vmatpush1.bf16.msra.mxu0 %v1197
    %1491 = vmatprep.subr.bf16.mxu0 0
    %1492 = vmatpush1.bf16.msra.mxu0 0
    %1493 = vmatprep.subr.bf16.mxu0 0
    %1494 = vmatpush1.bf16.msra.mxu0 0
    %1495 = vmatprep.subr.bf16.mxu0 0
    %1496 = vmatpush1.bf16.msra.mxu0 0
    %1497 = vmatprep.subr.bf16.mxu0 0
    %1498 = vmatpush1.bf16.msra.mxu0 0
    %1499 = vmatprep.subr.bf16.mxu0 0
    %1500 = vmatpush1.bf16.msra.mxu0 0
    %1501 = vmatprep.subr.bf16.mxu0 0
    %1502 = vmatpush1.bf16.msra.mxu0 0
    %1503 = vmatprep.subr.bf16.mxu0 0
    %1504 = vmatpush1.bf16.msra.mxu0 0
    %1505 = vmatprep.subr.bf16.mxu0 0
    %1506 = vmatpush1.bf16.msra.mxu0 0
    %1507 = vmatprep.subr.bf16.mxu0 0
    %1508 = vmatpush1.bf16.msra.mxu0 0
    %1509 = vmatprep.subr.bf16.mxu0 0
    %1510 = vmatpush1.bf16.msra.mxu0 0
    %1511 = vmatprep.subr.bf16.mxu0 0
    %1512 = vmatpush1.bf16.msra.mxu0 0
    %1513 = vmatprep.subr.bf16.mxu0 0
    %1514 = vmatpush1.bf16.msra.mxu0 0
    %1515 = vmatprep.subr.bf16.mxu0 0
    %1516 = vmatpush1.bf16.msra.mxu0 0
    %1517 = vmatprep.subr.bf16.mxu0 0
    %1518 = vmatpush1.bf16.msra.mxu0 0
    %1519 = vmatprep.subr.bf16.mxu0 0
    %1520 = vmatpush1.bf16.msra.mxu0 0
    %1521 = vmatprep.mubr.bf16.mxu0 0
    %1522 = vmatmul.mubr.bf16.gmra.mrb[0].mxu0 %v1151
    %v1523 = vpop.f32.mrb[0].mxu0
    %v1524 = vadd.f32 %v1026, %v1523
    %v1525 = vpop.f32.mrb[0].mxu0
    %v1526 = vadd.f32 %v1030, %v1525
    %v1527 = vpop.f32.mrb[0].mxu0
    %v1528 = vpop.f32.mrb[0].mxu0
    %1529 = vdwg.mxu0
    %v1530 = vmax.f32 %v1237, 0.0
    %v1531 = vmax.f32 %v1239, 0.0
    %v1532 = vmax.f32 %v1278, 0.0
    %v1533 = vmax.f32 %v1280, 0.0
    %v1534 = vmax.f32 %v1319, 0.0
    %v1535 = vmax.f32 %v1321, 0.0
    %v1536 = vmax.f32 %v1360, 0.0
    %v1537 = vmax.f32 %v1362, 0.0
    %v1538 = vmax.f32 %v1401, 0.0
    %v1539 = vmax.f32 %v1403, 0.0
    %v1540 = vmax.f32 %v1442, 0.0
    %v1541 = vmax.f32 %v1444, 0.0
    %v1542 = vmax.f32 %v1483, 0.0
    %v1543 = vmax.f32 %v1485, 0.0
    %v1544 = vmax.f32 %v1524, 0.0
    %v1545 = vmax.f32 %v1526, 0.0
    %v1546 = vpack.c.bf16 %v1530, %v1530
    %v1547 = vpack.c.bf16 %v1531, %v1531
    %v1548 = vpack.c.bf16 %v1532, %v1532
    %v1549 = vpack.c.bf16 %v1533, %v1533
    %v1550 = vpack.c.bf16 %v1534, %v1534
    %v1551 = vpack.c.bf16 %v1535, %v1535
    %v1552 = vpack.c.bf16 %v1536, %v1536
    %v1553 = vpack.c.bf16 %v1537, %v1537
    %v1554 = vpack.c.bf16 %v1538, %v1538
    %v1555 = vpack.c.bf16 %v1539, %v1539
    %v1556 = vpack.c.bf16 %v1540, %v1540
    %v1557 = vpack.c.bf16 %v1541, %v1541
    %v1558 = vpack.c.bf16 %v1542, %v1542
    %v1559 = vpack.c.bf16 %v1543, %v1543
    %v1560 = vpack.c.bf16 %v1544, %v1544
    %v1561 = vpack.c.bf16 %v1545, %v1545
    %v1562 = vld [vmem:[%s9] sm:$0xf]
    %v1563 = vld [vmem:[%s9 + $0x4] sm:$0xf]
    %v1564 = vld [vmem:[%s9 + $0x8] sm:$0xf]
    %v1565 = vld [vmem:[%s9 + $0xc] sm:$0xf]
    %v1566 = vld [vmem:[%s9 + $0x10] sm:$0xf]
    %v1567 = vld [vmem:[%s9 + $0x14] sm:$0xf]
    %v1568 = vld [vmem:[%s9 + $0x18] sm:$0xf]
    %v1569 = vld [vmem:[%s9 + $0x1c] sm:$0xf]
    %v1570 = vld [vmem:[%s9 + $0x20] sm:$0xf]
    %v1571 = vld [vmem:[%s9 + $0x24] sm:$0xf]
    %v1572 = vld [vmem:[%s9 + $0x28] sm:$0xf]
    %v1573 = vld [vmem:[%s9 + $0x2c] sm:$0xf]
    %v1574 = vld [vmem:[%s9 + $0x30] sm:$0xf]
    %v1575 = vld [vmem:[%s9 + $0x34] sm:$0xf]
    %v1576 = vld [vmem:[%s9 + $0x38] sm:$0xf]
    %v1577 = vld [vmem:[%s9 + $0x3c] sm:$0xf]
    %v1578 = vld [vmem:[%s9 + $0x40] sm:$0xf]
    %v1579 = vld [vmem:[%s9 + $0x44] sm:$0xf]
    %v1580 = vld [vmem:[%s9 + $0x48] sm:$0xf]
    %v1581 = vld [vmem:[%s9 + $0x4c] sm:$0xf]
    %v1582 = vld [vmem:[%s9 + $0x50] sm:$0xf]
    %v1583 = vld [vmem:[%s9 + $0x54] sm:$0xf]
    %v1584 = vld [vmem:[%s9 + $0x58] sm:$0xf]
    %v1585 = vld [vmem:[%s9 + $0x5c] sm:$0xf]
    %v1586 = vld [vmem:[%s9 + $0x60] sm:$0xf]
    %v1587 = vld [vmem:[%s9 + $0x64] sm:$0xf]
    %v1588 = vld [vmem:[%s9 + $0x68] sm:$0xf]
    %v1589 = vld [vmem:[%s9 + $0x6c] sm:$0xf]
    %v1590 = vld [vmem:[%s9 + $0x70] sm:$0xf]
    %v1591 = vld [vmem:[%s9 + $0x74] sm:$0xf]
    %v1592 = vld [vmem:[%s9 + $0x78] sm:$0xf]
    %v1593 = vld [vmem:[%s9 + $0x7c] sm:$0xf]
    %v1594 = vld [vmem:[%s9 + $0x80] sm:$0xf]
    %v1595 = vld [vmem:[%s9 + $0x84] sm:$0xf]
    %v1596 = vld [vmem:[%s9 + $0x88] sm:$0xf]
    %v1597 = vld [vmem:[%s9 + $0x8c] sm:$0xf]
    %v1598 = vld [vmem:[%s9 + $0x90] sm:$0xf]
    %v1599 = vld [vmem:[%s9 + $0x94] sm:$0xf]
    %v1600 = vld [vmem:[%s9 + $0x98] sm:$0xf]
    %v1601 = vld [vmem:[%s9 + $0x9c] sm:$0xf]
    %v1602 = vld [vmem:[%s9 + $0xa0] sm:$0xf]
    %v1603 = vld [vmem:[%s9 + $0xa4] sm:$0xf]
    %v1604 = vld [vmem:[%s9 + $0xa8] sm:$0xf]
    %v1605 = vld [vmem:[%s9 + $0xac] sm:$0xf]
    %v1606 = vld [vmem:[%s9 + $0xb0] sm:$0xf]
    %v1607 = vld [vmem:[%s9 + $0xb4] sm:$0xf]
    %v1608 = vld [vmem:[%s9 + $0xb8] sm:$0xf]
    %v1609 = vld [vmem:[%s9 + $0xbc] sm:$0xf]
    %v1610 = vld [vmem:[%s9 + $0xc0] sm:$0xf]
    %v1611 = vld [vmem:[%s9 + $0xc4] sm:$0xf]
    %v1612 = vld [vmem:[%s9 + $0xc8] sm:$0xf]
    %v1613 = vld [vmem:[%s9 + $0xcc] sm:$0xf]
    %v1614 = vld [vmem:[%s9 + $0xd0] sm:$0xf]
    %v1615 = vld [vmem:[%s9 + $0xd4] sm:$0xf]
    %v1616 = vld [vmem:[%s9 + $0xd8] sm:$0xf]
    %v1617 = vld [vmem:[%s9 + $0xdc] sm:$0xf]
    %v1618 = vld [vmem:[%s9 + $0xe0] sm:$0xf]
    %v1619 = vld [vmem:[%s9 + $0xe4] sm:$0xf]
    %v1620 = vld [vmem:[%s9 + $0xe8] sm:$0xf]
    %v1621 = vld [vmem:[%s9 + $0xec] sm:$0xf]
    %v1622 = vld [vmem:[%s9 + $0xf0] sm:$0xf]
    %v1623 = vld [vmem:[%s9 + $0xf4] sm:$0xf]
    %v1624 = vld [vmem:[%s9 + $0xf8] sm:$0xf]
    %v1625 = vld [vmem:[%s9 + $0xfc] sm:$0xf]
    %v1626 = vld [vmem:[%s9 + $0x100] sm:$0xf]
    %v1627 = vld [vmem:[%s9 + $0x104] sm:$0xf]
    %v1628 = vld [vmem:[%s9 + $0x108] sm:$0xf]
    %v1629 = vld [vmem:[%s9 + $0x10c] sm:$0xf]
    %v1630 = vld [vmem:[%s9 + $0x110] sm:$0xf]
    %v1631 = vld [vmem:[%s9 + $0x114] sm:$0xf]
    %v1632 = vld [vmem:[%s9 + $0x118] sm:$0xf]
    %v1633 = vld [vmem:[%s9 + $0x11c] sm:$0xf]
    %v1634 = vld [vmem:[%s9 + $0x120] sm:$0xf]
    %v1635 = vld [vmem:[%s9 + $0x124] sm:$0xf]
    %v1636 = vld [vmem:[%s9 + $0x128] sm:$0xf]
    %v1637 = vld [vmem:[%s9 + $0x12c] sm:$0xf]
    %v1638 = vld [vmem:[%s9 + $0x130] sm:$0xf]
    %v1639 = vld [vmem:[%s9 + $0x134] sm:$0xf]
    %v1640 = vld [vmem:[%s9 + $0x138] sm:$0xf]
    %v1641 = vld [vmem:[%s9 + $0x13c] sm:$0xf]
    %v1642 = vld [vmem:[%s9 + $0x140] sm:$0xf]
    %v1643 = vld [vmem:[%s9 + $0x144] sm:$0xf]
    %v1644 = vld [vmem:[%s9 + $0x148] sm:$0xf]
    %v1645 = vld [vmem:[%s9 + $0x14c] sm:$0xf]
    %v1646 = vld [vmem:[%s9 + $0x150] sm:$0xf]
    %v1647 = vld [vmem:[%s9 + $0x154] sm:$0xf]
    %v1648 = vld [vmem:[%s9 + $0x158] sm:$0xf]
    %v1649 = vld [vmem:[%s9 + $0x15c] sm:$0xf]
    %v1650 = vld [vmem:[%s9 + $0x160] sm:$0xf]
    %v1651 = vld [vmem:[%s9 + $0x164] sm:$0xf]
    %v1652 = vld [vmem:[%s9 + $0x168] sm:$0xf]
    %v1653 = vld [vmem:[%s9 + $0x16c] sm:$0xf]
    %v1654 = vld [vmem:[%s9 + $0x170] sm:$0xf]
    %v1655 = vld [vmem:[%s9 + $0x174] sm:$0xf]
    %v1656 = vld [vmem:[%s9 + $0x178] sm:$0xf]
    %v1657 = vld [vmem:[%s9 + $0x17c] sm:$0xf]
    %v1658 = vld [vmem:[%s9 + $0x180] sm:$0xf]
    %v1659 = vld [vmem:[%s9 + $0x184] sm:$0xf]
    %v1660 = vld [vmem:[%s9 + $0x188] sm:$0xf]
    %v1661 = vld [vmem:[%s9 + $0x18c] sm:$0xf]
    %v1662 = vld [vmem:[%s9 + $0x190] sm:$0xf]
    %v1663 = vld [vmem:[%s9 + $0x194] sm:$0xf]
    %v1664 = vld [vmem:[%s9 + $0x198] sm:$0xf]
    %v1665 = vld [vmem:[%s9 + $0x19c] sm:$0xf]
    %v1666 = vld [vmem:[%s9 + $0x1a0] sm:$0xf]
    %v1667 = vld [vmem:[%s9 + $0x1a4] sm:$0xf]
    %v1668 = vld [vmem:[%s9 + $0x1a8] sm:$0xf]
    %v1669 = vld [vmem:[%s9 + $0x1ac] sm:$0xf]
    %v1670 = vld [vmem:[%s9 + $0x1b0] sm:$0xf]
    %v1671 = vld [vmem:[%s9 + $0x1b4] sm:$0xf]
    %v1672 = vld [vmem:[%s9 + $0x1b8] sm:$0xf]
    %v1673 = vld [vmem:[%s9 + $0x1bc] sm:$0xf]
    %v1674 = vld [vmem:[%s9 + $0x1c0] sm:$0xf]
    %v1675 = vld [vmem:[%s9 + $0x1c4] sm:$0xf]
    %v1676 = vld [vmem:[%s9 + $0x1c8] sm:$0xf]
    %v1677 = vld [vmem:[%s9 + $0x1cc] sm:$0xf]
    %v1678 = vld [vmem:[%s9 + $0x1d0] sm:$0xf]
    %v1679 = vld [vmem:[%s9 + $0x1d4] sm:$0xf]
    %v1680 = vld [vmem:[%s9 + $0x1d8] sm:$0xf]
    %v1681 = vld [vmem:[%s9 + $0x1dc] sm:$0xf]
    %v1682 = vld [vmem:[%s9 + $0x1e0] sm:$0xf]
    %v1683 = vld [vmem:[%s9 + $0x1e4] sm:$0xf]
    %v1684 = vld [vmem:[%s9 + $0x1e8] sm:$0xf]
    %v1685 = vld [vmem:[%s9 + $0x1ec] sm:$0xf]
    %v1686 = vld [vmem:[%s9 + $0x1f0] sm:$0xf]
    %v1687 = vld [vmem:[%s9 + $0x1f4] sm:$0xf]
    %v1688 = vld [vmem:[%s9 + $0x1f8] sm:$0xf]
    %v1689 = vld [vmem:[%s9 + $0x1fc] sm:$0xf]
    %v1690 = vld [vmem:[%s9 + $0x200] sm:$0xf]
    %v1691 = vld [vmem:[%s9 + $0x204] sm:$0xf]
    %v1692 = vld [vmem:[%s9 + $0x208] sm:$0xf]
    %v1693 = vld [vmem:[%s9 + $0x20c] sm:$0xf]
    %v1694 = vld [vmem:[%s9 + $0x210] sm:$0xf]
    %v1695 = vld [vmem:[%s9 + $0x214] sm:$0xf]
    %v1696 = vld [vmem:[%s9 + $0x218] sm:$0xf]
    %v1697 = vld [vmem:[%s9 + $0x21c] sm:$0xf]
    %v1698 = vld [vmem:[%s9 + $0x220] sm:$0xf]
    %v1699 = vld [vmem:[%s9 + $0x224] sm:$0xf]
    %v1700 = vld [vmem:[%s9 + $0x228] sm:$0xf]
    %v1701 = vld [vmem:[%s9 + $0x22c] sm:$0xf]
    %v1702 = vld [vmem:[%s9 + $0x230] sm:$0xf]
    %v1703 = vld [vmem:[%s9 + $0x234] sm:$0xf]
    %v1704 = vld [vmem:[%s9 + $0x238] sm:$0xf]
    %v1705 = vld [vmem:[%s9 + $0x23c] sm:$0xf]
    %v1706 = vld [vmem:[%s9 + $0x240] sm:$0xf]
    %v1707 = vld [vmem:[%s9 + $0x244] sm:$0xf]
    %v1708 = vld [vmem:[%s9 + $0x248] sm:$0xf]
    %v1709 = vld [vmem:[%s9 + $0x24c] sm:$0xf]
    %v1710 = vld [vmem:[%s9 + $0x250] sm:$0xf]
    %v1711 = vld [vmem:[%s9 + $0x254] sm:$0xf]
    %v1712 = vld [vmem:[%s9 + $0x258] sm:$0xf]
    %v1713 = vld [vmem:[%s9 + $0x25c] sm:$0xf]
    %v1714 = vld [vmem:[%s9 + $0x260] sm:$0xf]
    %v1715 = vld [vmem:[%s9 + $0x264] sm:$0xf]
    %v1716 = vld [vmem:[%s9 + $0x268] sm:$0xf]
    %v1717 = vld [vmem:[%s9 + $0x26c] sm:$0xf]
    %v1718 = vld [vmem:[%s9 + $0x270] sm:$0xf]
    %v1719 = vld [vmem:[%s9 + $0x274] sm:$0xf]
    %v1720 = vld [vmem:[%s9 + $0x278] sm:$0xf]
    %v1721 = vld [vmem:[%s9 + $0x27c] sm:$0xf]
    %v1722 = vld [vmem:[%s9 + $0x280] sm:$0xf]
    %v1723 = vld [vmem:[%s9 + $0x284] sm:$0xf]
    %v1724 = vld [vmem:[%s9 + $0x288] sm:$0xf]
    %v1725 = vld [vmem:[%s9 + $0x28c] sm:$0xf]
    %v1726 = vld [vmem:[%s9 + $0x290] sm:$0xf]
    %v1727 = vld [vmem:[%s9 + $0x294] sm:$0xf]
    %v1728 = vld [vmem:[%s9 + $0x298] sm:$0xf]
    %v1729 = vld [vmem:[%s9 + $0x29c] sm:$0xf]
    %v1730 = vld [vmem:[%s9 + $0x2a0] sm:$0xf]
    %v1731 = vld [vmem:[%s9 + $0x2a4] sm:$0xf]
    %v1732 = vld [vmem:[%s9 + $0x2a8] sm:$0xf]
    %v1733 = vld [vmem:[%s9 + $0x2ac] sm:$0xf]
    %v1734 = vld [vmem:[%s9 + $0x2b0] sm:$0xf]
    %v1735 = vld [vmem:[%s9 + $0x2b4] sm:$0xf]
    %v1736 = vld [vmem:[%s9 + $0x2b8] sm:$0xf]
    %v1737 = vld [vmem:[%s9 + $0x2bc] sm:$0xf]
    %v1738 = vld [vmem:[%s9 + $0x2c0] sm:$0xf]
    %v1739 = vld [vmem:[%s9 + $0x2c4] sm:$0xf]
    %v1740 = vld [vmem:[%s9 + $0x2c8] sm:$0xf]
    %v1741 = vld [vmem:[%s9 + $0x2cc] sm:$0xf]
    %v1742 = vld [vmem:[%s9 + $0x2d0] sm:$0xf]
    %v1743 = vld [vmem:[%s9 + $0x2d4] sm:$0xf]
    %v1744 = vld [vmem:[%s9 + $0x2d8] sm:$0xf]
    %v1745 = vld [vmem:[%s9 + $0x2dc] sm:$0xf]
    %v1746 = vld [vmem:[%s9 + $0x2e0] sm:$0xf]
    %v1747 = vld [vmem:[%s9 + $0x2e4] sm:$0xf]
    %v1748 = vld [vmem:[%s9 + $0x2e8] sm:$0xf]
    %v1749 = vld [vmem:[%s9 + $0x2ec] sm:$0xf]
    %v1750 = vld [vmem:[%s9 + $0x2f0] sm:$0xf]
    %v1751 = vld [vmem:[%s9 + $0x2f4] sm:$0xf]
    %v1752 = vld [vmem:[%s9 + $0x2f8] sm:$0xf]
    %v1753 = vld [vmem:[%s9 + $0x2fc] sm:$0xf]
    %v1754 = vld [vmem:[%s9 + $0x300] sm:$0xf]
    %v1755 = vld [vmem:[%s9 + $0x304] sm:$0xf]
    %v1756 = vld [vmem:[%s9 + $0x308] sm:$0xf]
    %v1757 = vld [vmem:[%s9 + $0x30c] sm:$0xf]
    %v1758 = vld [vmem:[%s9 + $0x310] sm:$0xf]
    %v1759 = vld [vmem:[%s9 + $0x314] sm:$0xf]
    %v1760 = vld [vmem:[%s9 + $0x318] sm:$0xf]
    %v1761 = vld [vmem:[%s9 + $0x31c] sm:$0xf]
    %v1762 = vld [vmem:[%s9 + $0x320] sm:$0xf]
    %v1763 = vld [vmem:[%s9 + $0x324] sm:$0xf]
    %v1764 = vld [vmem:[%s9 + $0x328] sm:$0xf]
    %v1765 = vld [vmem:[%s9 + $0x32c] sm:$0xf]
    %v1766 = vld [vmem:[%s9 + $0x330] sm:$0xf]
    %v1767 = vld [vmem:[%s9 + $0x334] sm:$0xf]
    %v1768 = vld [vmem:[%s9 + $0x338] sm:$0xf]
    %v1769 = vld [vmem:[%s9 + $0x33c] sm:$0xf]
    %v1770 = vld [vmem:[%s9 + $0x340] sm:$0xf]
    %v1771 = vld [vmem:[%s9 + $0x344] sm:$0xf]
    %v1772 = vld [vmem:[%s9 + $0x348] sm:$0xf]
    %v1773 = vld [vmem:[%s9 + $0x34c] sm:$0xf]
    %v1774 = vld [vmem:[%s9 + $0x350] sm:$0xf]
    %v1775 = vld [vmem:[%s9 + $0x354] sm:$0xf]
    %v1776 = vld [vmem:[%s9 + $0x358] sm:$0xf]
    %v1777 = vld [vmem:[%s9 + $0x35c] sm:$0xf]
    %v1778 = vld [vmem:[%s9 + $0x360] sm:$0xf]
    %v1779 = vld [vmem:[%s9 + $0x364] sm:$0xf]
    %v1780 = vld [vmem:[%s9 + $0x368] sm:$0xf]
    %v1781 = vld [vmem:[%s9 + $0x36c] sm:$0xf]
    %v1782 = vld [vmem:[%s9 + $0x370] sm:$0xf]
    %v1783 = vld [vmem:[%s9 + $0x374] sm:$0xf]
    %v1784 = vld [vmem:[%s9 + $0x378] sm:$0xf]
    %v1785 = vld [vmem:[%s9 + $0x37c] sm:$0xf]
    %v1786 = vld [vmem:[%s9 + $0x380] sm:$0xf]
    %v1787 = vld [vmem:[%s9 + $0x384] sm:$0xf]
    %v1788 = vld [vmem:[%s9 + $0x388] sm:$0xf]
    %v1789 = vld [vmem:[%s9 + $0x38c] sm:$0xf]
    %v1790 = vld [vmem:[%s9 + $0x390] sm:$0xf]
    %v1791 = vld [vmem:[%s9 + $0x394] sm:$0xf]
    %v1792 = vld [vmem:[%s9 + $0x398] sm:$0xf]
    %v1793 = vld [vmem:[%s9 + $0x39c] sm:$0xf]
    %v1794 = vld [vmem:[%s9 + $0x3a0] sm:$0xf]
    %v1795 = vld [vmem:[%s9 + $0x3a4] sm:$0xf]
    %v1796 = vld [vmem:[%s9 + $0x3a8] sm:$0xf]
    %v1797 = vld [vmem:[%s9 + $0x3ac] sm:$0xf]
    %v1798 = vld [vmem:[%s9 + $0x3b0] sm:$0xf]
    %v1799 = vld [vmem:[%s9 + $0x3b4] sm:$0xf]
    %v1800 = vld [vmem:[%s9 + $0x3b8] sm:$0xf]
    %v1801 = vld [vmem:[%s9 + $0x3bc] sm:$0xf]
    %v1802 = vld [vmem:[%s9 + $0x3c0] sm:$0xf]
    %v1803 = vld [vmem:[%s9 + $0x3c4] sm:$0xf]
    %v1804 = vld [vmem:[%s9 + $0x3c8] sm:$0xf]
    %v1805 = vld [vmem:[%s9 + $0x3cc] sm:$0xf]
    %v1806 = vld [vmem:[%s9 + $0x3d0] sm:$0xf]
    %v1807 = vld [vmem:[%s9 + $0x3d4] sm:$0xf]
    %v1808 = vld [vmem:[%s9 + $0x3d8] sm:$0xf]
    %v1809 = vld [vmem:[%s9 + $0x3dc] sm:$0xf]
    %v1810 = vld [vmem:[%s9 + $0x3e0] sm:$0xf]
    %v1811 = vld [vmem:[%s9 + $0x3e4] sm:$0xf]
    %v1812 = vld [vmem:[%s9 + $0x3e8] sm:$0xf]
    %v1813 = vld [vmem:[%s9 + $0x3ec] sm:$0xf]
    %v1814 = vld [vmem:[%s9 + $0x3f0] sm:$0xf]
    %v1815 = vld [vmem:[%s9 + $0x3f4] sm:$0xf]
    %v1816 = vld [vmem:[%s9 + $0x3f8] sm:$0xf]
    %v1817 = vld [vmem:[%s9 + $0x3fc] sm:$0xf]
    %v1818 = vld [vmem:[%s10] sm:$0x1]
    %v1820 = vlaneseq
    %v1821 = vshrl.u32 %v1820, 7
    %v1822 = vsub.s32 0, %v1821
    %v1823 = vrot.slane %v1818, %v1822
    %v2081 = vunpack.c.l.b16 %v1562
    %v2082 = vunpack.c.l.b16 %v1563
    %v2083 = vunpack.c.l.b16 %v1564
    %v2084 = vunpack.c.l.b16 %v1565
    %v2085 = vunpack.c.l.b16 %v1566
    %v2086 = vunpack.c.l.b16 %v1567
    %v2087 = vunpack.c.l.b16 %v1568
    %v2088 = vunpack.c.l.b16 %v1569
    %v2089 = vunpack.c.l.b16 %v1570
    %v2090 = vunpack.c.l.b16 %v1571
    %v2091 = vunpack.c.l.b16 %v1572
    %v2092 = vunpack.c.l.b16 %v1573
    %v2093 = vunpack.c.l.b16 %v1574
    %v2094 = vunpack.c.l.b16 %v1575
    %v2095 = vunpack.c.l.b16 %v1576
    %v2096 = vunpack.c.l.b16 %v1577
    %v2097 = vunpack.c.l.b16 %v1578
    %v2098 = vunpack.c.l.b16 %v1579
    %v2099 = vunpack.c.l.b16 %v1580
    %v2100 = vunpack.c.l.b16 %v1581
    %v2101 = vunpack.c.l.b16 %v1582
    %v2102 = vunpack.c.l.b16 %v1583
    %v2103 = vunpack.c.l.b16 %v1584
    %v2104 = vunpack.c.l.b16 %v1585
    %v2105 = vunpack.c.l.b16 %v1586
    %v2106 = vunpack.c.l.b16 %v1587
    %v2107 = vunpack.c.l.b16 %v1588
    %v2108 = vunpack.c.l.b16 %v1589
    %v2109 = vunpack.c.l.b16 %v1590
    %v2110 = vunpack.c.l.b16 %v1591
    %v2111 = vunpack.c.l.b16 %v1592
    %v2112 = vunpack.c.l.b16 %v1593
    %v2113 = vunpack.c.l.b16 %v1594
    %v2114 = vunpack.c.l.b16 %v1595
    %v2115 = vunpack.c.l.b16 %v1596
    %v2116 = vunpack.c.l.b16 %v1597
    %v2117 = vunpack.c.l.b16 %v1598
    %v2118 = vunpack.c.l.b16 %v1599
    %v2119 = vunpack.c.l.b16 %v1600
    %v2120 = vunpack.c.l.b16 %v1601
    %v2121 = vunpack.c.l.b16 %v1602
    %v2122 = vunpack.c.l.b16 %v1603
    %v2123 = vunpack.c.l.b16 %v1604
    %v2124 = vunpack.c.l.b16 %v1605
    %v2125 = vunpack.c.l.b16 %v1606
    %v2126 = vunpack.c.l.b16 %v1607
    %v2127 = vunpack.c.l.b16 %v1608
    %v2128 = vunpack.c.l.b16 %v1609
    %v2129 = vunpack.c.l.b16 %v1610
    %v2130 = vunpack.c.l.b16 %v1611
    %v2131 = vunpack.c.l.b16 %v1612
    %v2132 = vunpack.c.l.b16 %v1613
    %v2133 = vunpack.c.l.b16 %v1614
    %v2134 = vunpack.c.l.b16 %v1615
    %v2135 = vunpack.c.l.b16 %v1616
    %v2136 = vunpack.c.l.b16 %v1617
    %v2137 = vunpack.c.l.b16 %v1618
    %v2138 = vunpack.c.l.b16 %v1619
    %v2139 = vunpack.c.l.b16 %v1620
    %v2140 = vunpack.c.l.b16 %v1621
    %v2141 = vunpack.c.l.b16 %v1622
    %v2142 = vunpack.c.l.b16 %v1623
    %v2143 = vunpack.c.l.b16 %v1624
    %v2144 = vunpack.c.l.b16 %v1625
    %v2145 = vunpack.c.l.b16 %v1626
    %v2146 = vunpack.c.l.b16 %v1627
    %v2147 = vunpack.c.l.b16 %v1628
    %v2148 = vunpack.c.l.b16 %v1629
    %v2149 = vunpack.c.l.b16 %v1630
    %v2150 = vunpack.c.l.b16 %v1631
    %v2151 = vunpack.c.l.b16 %v1632
    %v2152 = vunpack.c.l.b16 %v1633
    %v2153 = vunpack.c.l.b16 %v1634
    %v2154 = vunpack.c.l.b16 %v1635
    %v2155 = vunpack.c.l.b16 %v1636
    %v2156 = vunpack.c.l.b16 %v1637
    %v2157 = vunpack.c.l.b16 %v1638
    %v2158 = vunpack.c.l.b16 %v1639
    %v2159 = vunpack.c.l.b16 %v1640
    %v2160 = vunpack.c.l.b16 %v1641
    %v2161 = vunpack.c.l.b16 %v1642
    %v2162 = vunpack.c.l.b16 %v1643
    %v2163 = vunpack.c.l.b16 %v1644
    %v2164 = vunpack.c.l.b16 %v1645
    %v2165 = vunpack.c.l.b16 %v1646
    %v2166 = vunpack.c.l.b16 %v1647
    %v2167 = vunpack.c.l.b16 %v1648
    %v2168 = vunpack.c.l.b16 %v1649
    %v2169 = vunpack.c.l.b16 %v1650
    %v2170 = vunpack.c.l.b16 %v1651
    %v2171 = vunpack.c.l.b16 %v1652
    %v2172 = vunpack.c.l.b16 %v1653
    %v2173 = vunpack.c.l.b16 %v1654
    %v2174 = vunpack.c.l.b16 %v1655
    %v2175 = vunpack.c.l.b16 %v1656
    %v2176 = vunpack.c.l.b16 %v1657
    %v2177 = vunpack.c.l.b16 %v1658
    %v2178 = vunpack.c.l.b16 %v1659
    %v2179 = vunpack.c.l.b16 %v1660
    %v2180 = vunpack.c.l.b16 %v1661
    %v2181 = vunpack.c.l.b16 %v1662
    %v2182 = vunpack.c.l.b16 %v1663
    %v2183 = vunpack.c.l.b16 %v1664
    %v2184 = vunpack.c.l.b16 %v1665
    %v2185 = vunpack.c.l.b16 %v1666
    %v2186 = vunpack.c.l.b16 %v1667
    %v2187 = vunpack.c.l.b16 %v1668
    %v2188 = vunpack.c.l.b16 %v1669
    %v2189 = vunpack.c.l.b16 %v1670
    %v2190 = vunpack.c.l.b16 %v1671
    %v2191 = vunpack.c.l.b16 %v1672
    %v2192 = vunpack.c.l.b16 %v1673
    %v2193 = vunpack.c.l.b16 %v1674
    %v2194 = vunpack.c.l.b16 %v1675
    %v2195 = vunpack.c.l.b16 %v1676
    %v2196 = vunpack.c.l.b16 %v1677
    %v2197 = vunpack.c.l.b16 %v1678
    %v2198 = vunpack.c.l.b16 %v1679
    %v2199 = vunpack.c.l.b16 %v1680
    %v2200 = vunpack.c.l.b16 %v1681
    %v2201 = vunpack.c.l.b16 %v1682
    %v2202 = vunpack.c.l.b16 %v1683
    %v2203 = vunpack.c.l.b16 %v1684
    %v2204 = vunpack.c.l.b16 %v1685
    %v2205 = vunpack.c.l.b16 %v1686
    %v2206 = vunpack.c.l.b16 %v1687
    %v2207 = vunpack.c.l.b16 %v1688
    %v2208 = vunpack.c.l.b16 %v1689
    %v2209 = vunpack.c.l.b16 %v1690
    %v2210 = vunpack.c.l.b16 %v1691
    %v2211 = vunpack.c.l.b16 %v1692
    %v2212 = vunpack.c.l.b16 %v1693
    %v2213 = vunpack.c.l.b16 %v1694
    %v2214 = vunpack.c.l.b16 %v1695
    %v2215 = vunpack.c.l.b16 %v1696
    %v2216 = vunpack.c.l.b16 %v1697
    %v2217 = vunpack.c.l.b16 %v1698
    %v2218 = vunpack.c.l.b16 %v1699
    %v2219 = vunpack.c.l.b16 %v1700
    %v2220 = vunpack.c.l.b16 %v1701
    %v2221 = vunpack.c.l.b16 %v1702
    %v2222 = vunpack.c.l.b16 %v1703
    %v2223 = vunpack.c.l.b16 %v1704
    %v2224 = vunpack.c.l.b16 %v1705
    %v2225 = vunpack.c.l.b16 %v1706
    %v2226 = vunpack.c.l.b16 %v1707
    %v2227 = vunpack.c.l.b16 %v1708
    %v2228 = vunpack.c.l.b16 %v1709
    %v2229 = vunpack.c.l.b16 %v1710
    %v2230 = vunpack.c.l.b16 %v1711
    %v2231 = vunpack.c.l.b16 %v1712
    %v2232 = vunpack.c.l.b16 %v1713
    %v2233 = vunpack.c.l.b16 %v1714
    %v2234 = vunpack.c.l.b16 %v1715
    %v2235 = vunpack.c.l.b16 %v1716
    %v2236 = vunpack.c.l.b16 %v1717
    %v2237 = vunpack.c.l.b16 %v1718
    %v2238 = vunpack.c.l.b16 %v1719
    %v2239 = vunpack.c.l.b16 %v1720
    %v2240 = vunpack.c.l.b16 %v1721
    %v2241 = vunpack.c.l.b16 %v1722
    %v2242 = vunpack.c.l.b16 %v1723
    %v2243 = vunpack.c.l.b16 %v1724
    %v2244 = vunpack.c.l.b16 %v1725
    %v2245 = vunpack.c.l.b16 %v1726
    %v2246 = vunpack.c.l.b16 %v1727
    %v2247 = vunpack.c.l.b16 %v1728
    %v2248 = vunpack.c.l.b16 %v1729
    %v2249 = vunpack.c.l.b16 %v1730
    %v2250 = vunpack.c.l.b16 %v1731
    %v2251 = vunpack.c.l.b16 %v1732
    %v2252 = vunpack.c.l.b16 %v1733
    %v2253 = vunpack.c.l.b16 %v1734
    %v2254 = vunpack.c.l.b16 %v1735
    %v2255 = vunpack.c.l.b16 %v1736
    %v2256 = vunpack.c.l.b16 %v1737
    %v2257 = vunpack.c.l.b16 %v1738
    %v2258 = vunpack.c.l.b16 %v1739
    %v2259 = vunpack.c.l.b16 %v1740
    %v2260 = vunpack.c.l.b16 %v1741
    %v2261 = vunpack.c.l.b16 %v1742
    %v2262 = vunpack.c.l.b16 %v1743
    %v2263 = vunpack.c.l.b16 %v1744
    %v2264 = vunpack.c.l.b16 %v1745
    %v2265 = vunpack.c.l.b16 %v1746
    %v2266 = vunpack.c.l.b16 %v1747
    %v2267 = vunpack.c.l.b16 %v1748
    %v2268 = vunpack.c.l.b16 %v1749
    %v2269 = vunpack.c.l.b16 %v1750
    %v2270 = vunpack.c.l.b16 %v1751
    %v2271 = vunpack.c.l.b16 %v1752
    %v2272 = vunpack.c.l.b16 %v1753
    %v2273 = vunpack.c.l.b16 %v1754
    %v2274 = vunpack.c.l.b16 %v1755
    %v2275 = vunpack.c.l.b16 %v1756
    %v2276 = vunpack.c.l.b16 %v1757
    %v2277 = vunpack.c.l.b16 %v1758
    %v2278 = vunpack.c.l.b16 %v1759
    %v2279 = vunpack.c.l.b16 %v1760
    %v2280 = vunpack.c.l.b16 %v1761
    %v2281 = vunpack.c.l.b16 %v1762
    %v2282 = vunpack.c.l.b16 %v1763
    %v2283 = vunpack.c.l.b16 %v1764
    %v2284 = vunpack.c.l.b16 %v1765
    %v2285 = vunpack.c.l.b16 %v1766
    %v2286 = vunpack.c.l.b16 %v1767
    %v2287 = vunpack.c.l.b16 %v1768
    %v2288 = vunpack.c.l.b16 %v1769
    %v2289 = vunpack.c.l.b16 %v1770
    %v2290 = vunpack.c.l.b16 %v1771
    %v2291 = vunpack.c.l.b16 %v1772
    %v2292 = vunpack.c.l.b16 %v1773
    %v2293 = vunpack.c.l.b16 %v1774
    %v2294 = vunpack.c.l.b16 %v1775
    %v2295 = vunpack.c.l.b16 %v1776
    %v2296 = vunpack.c.l.b16 %v1777
    %v2297 = vunpack.c.l.b16 %v1778
    %v2298 = vunpack.c.l.b16 %v1779
    %v2299 = vunpack.c.l.b16 %v1780
    %v2300 = vunpack.c.l.b16 %v1781
    %v2301 = vunpack.c.l.b16 %v1782
    %v2302 = vunpack.c.l.b16 %v1783
    %v2303 = vunpack.c.l.b16 %v1784
    %v2304 = vunpack.c.l.b16 %v1785
    %v2305 = vunpack.c.l.b16 %v1786
    %v2306 = vunpack.c.l.b16 %v1787
    %v2307 = vunpack.c.l.b16 %v1788
    %v2308 = vunpack.c.l.b16 %v1789
    %v2309 = vunpack.c.l.b16 %v1790
    %v2310 = vunpack.c.l.b16 %v1791
    %v2311 = vunpack.c.l.b16 %v1792
    %v2312 = vunpack.c.l.b16 %v1793
    %v2313 = vunpack.c.l.b16 %v1794
    %v2314 = vunpack.c.l.b16 %v1795
    %v2315 = vunpack.c.l.b16 %v1796
    %v2316 = vunpack.c.l.b16 %v1797
    %v2317 = vunpack.c.l.b16 %v1798
    %v2318 = vunpack.c.l.b16 %v1799
    %v2319 = vunpack.c.l.b16 %v1800
    %v2320 = vunpack.c.l.b16 %v1801
    %v2321 = vunpack.c.l.b16 %v1802
    %v2322 = vunpack.c.l.b16 %v1803
    %v2323 = vunpack.c.l.b16 %v1804
    %v2324 = vunpack.c.l.b16 %v1805
    %v2325 = vunpack.c.l.b16 %v1806
    %v2326 = vunpack.c.l.b16 %v1807
    %v2327 = vunpack.c.l.b16 %v1808
    %v2328 = vunpack.c.l.b16 %v1809
    %v2329 = vunpack.c.l.b16 %v1810
    %v2330 = vunpack.c.l.b16 %v1811
    %v2331 = vunpack.c.l.b16 %v1812
    %v2332 = vunpack.c.l.b16 %v1813
    %v2333 = vunpack.c.l.b16 %v1814
    %v2334 = vunpack.c.l.b16 %v1815
    %v2335 = vunpack.c.l.b16 %v1816
    %v2336 = vunpack.c.l.b16 %v1817
    %v2337 = vpack.c.b16 %v2082, %v2081
    %v2338 = vpack.c.b16 %v2084, %v2083
    %v2339 = vpack.c.b16 %v2086, %v2085
    %v2340 = vpack.c.b16 %v2088, %v2087
    %v2341 = vpack.c.b16 %v2090, %v2089
    %v2342 = vpack.c.b16 %v2092, %v2091
    %v2343 = vpack.c.b16 %v2094, %v2093
    %v2344 = vpack.c.b16 %v2096, %v2095
    %v2345 = vpack.c.b16 %v2098, %v2097
    %v2346 = vpack.c.b16 %v2100, %v2099
    %v2347 = vpack.c.b16 %v2102, %v2101
    %v2348 = vpack.c.b16 %v2104, %v2103
    %v2349 = vpack.c.b16 %v2106, %v2105
    %v2350 = vpack.c.b16 %v2108, %v2107
    %v2351 = vpack.c.b16 %v2110, %v2109
    %v2352 = vpack.c.b16 %v2112, %v2111
    %v2353 = vpack.c.b16 %v2114, %v2113
    %v2354 = vpack.c.b16 %v2116, %v2115
    %v2355 = vpack.c.b16 %v2118, %v2117
    %v2356 = vpack.c.b16 %v2120, %v2119
    %v2357 = vpack.c.b16 %v2122, %v2121
    %v2358 = vpack.c.b16 %v2124, %v2123
    %v2359 = vpack.c.b16 %v2126, %v2125
    %v2360 = vpack.c.b16 %v2128, %v2127
    %v2361 = vpack.c.b16 %v2130, %v2129
    %v2362 = vpack.c.b16 %v2132, %v2131
    %v2363 = vpack.c.b16 %v2134, %v2133
    %v2364 = vpack.c.b16 %v2136, %v2135
    %v2365 = vpack.c.b16 %v2138, %v2137
    %v2366 = vpack.c.b16 %v2140, %v2139
    %v2367 = vpack.c.b16 %v2142, %v2141
    %v2368 = vpack.c.b16 %v2144, %v2143
    %v2369 = vpack.c.b16 %v2146, %v2145
    %v2370 = vpack.c.b16 %v2148, %v2147
    %v2371 = vpack.c.b16 %v2150, %v2149
    %v2372 = vpack.c.b16 %v2152, %v2151
    %v2373 = vpack.c.b16 %v2154, %v2153
    %v2374 = vpack.c.b16 %v2156, %v2155
    %v2375 = vpack.c.b16 %v2158, %v2157
    %v2376 = vpack.c.b16 %v2160, %v2159
    %v2377 = vpack.c.b16 %v2162, %v2161
    %v2378 = vpack.c.b16 %v2164, %v2163
    %v2379 = vpack.c.b16 %v2166, %v2165
    %v2380 = vpack.c.b16 %v2168, %v2167
    %v2381 = vpack.c.b16 %v2170, %v2169
    %v2382 = vpack.c.b16 %v2172, %v2171
    %v2383 = vpack.c.b16 %v2174, %v2173
    %v2384 = vpack.c.b16 %v2176, %v2175
    %v2385 = vpack.c.b16 %v2178, %v2177
    %v2386 = vpack.c.b16 %v2180, %v2179
    %v2387 = vpack.c.b16 %v2182, %v2181
    %v2388 = vpack.c.b16 %v2184, %v2183
    %v2389 = vpack.c.b16 %v2186, %v2185
    %v2390 = vpack.c.b16 %v2188, %v2187
    %v2391 = vpack.c.b16 %v2190, %v2189
    %v2392 = vpack.c.b16 %v2192, %v2191
    %v2393 = vpack.c.b16 %v2194, %v2193
    %v2394 = vpack.c.b16 %v2196, %v2195
    %v2395 = vpack.c.b16 %v2198, %v2197
    %v2396 = vpack.c.b16 %v2200, %v2199
    %v2397 = vpack.c.b16 %v2202, %v2201
    %v2398 = vpack.c.b16 %v2204, %v2203
    %v2399 = vpack.c.b16 %v2206, %v2205
    %v2400 = vpack.c.b16 %v2208, %v2207
    %v2401 = vpack.c.b16 %v2210, %v2209
    %v2402 = vpack.c.b16 %v2212, %v2211
    %v2403 = vpack.c.b16 %v2214, %v2213
    %v2404 = vpack.c.b16 %v2216, %v2215
    %v2405 = vpack.c.b16 %v2218, %v2217
    %v2406 = vpack.c.b16 %v2220, %v2219
    %v2407 = vpack.c.b16 %v2222, %v2221
    %v2408 = vpack.c.b16 %v2224, %v2223
    %v2409 = vpack.c.b16 %v2226, %v2225
    %v2410 = vpack.c.b16 %v2228, %v2227
    %v2411 = vpack.c.b16 %v2230, %v2229
    %v2412 = vpack.c.b16 %v2232, %v2231
    %v2413 = vpack.c.b16 %v2234, %v2233
    %v2414 = vpack.c.b16 %v2236, %v2235
    %v2415 = vpack.c.b16 %v2238, %v2237
    %v2416 = vpack.c.b16 %v2240, %v2239
    %v2417 = vpack.c.b16 %v2242, %v2241
    %v2418 = vpack.c.b16 %v2244, %v2243
    %v2419 = vpack.c.b16 %v2246, %v2245
    %v2420 = vpack.c.b16 %v2248, %v2247
    %v2421 = vpack.c.b16 %v2250, %v2249
    %v2422 = vpack.c.b16 %v2252, %v2251
    %v2423 = vpack.c.b16 %v2254, %v2253
    %v2424 = vpack.c.b16 %v2256, %v2255
    %v2425 = vpack.c.b16 %v2258, %v2257
    %v2426 = vpack.c.b16 %v2260, %v2259
    %v2427 = vpack.c.b16 %v2262, %v2261
    %v2428 = vpack.c.b16 %v2264, %v2263
    %v2429 = vpack.c.b16 %v2266, %v2265
    %v2430 = vpack.c.b16 %v2268, %v2267
    %v2431 = vpack.c.b16 %v2270, %v2269
    %v2432 = vpack.c.b16 %v2272, %v2271
    %v2433 = vpack.c.b16 %v2274, %v2273
    %v2434 = vpack.c.b16 %v2276, %v2275
    %v2435 = vpack.c.b16 %v2278, %v2277
    %v2436 = vpack.c.b16 %v2280, %v2279
    %v2437 = vpack.c.b16 %v2282, %v2281
    %v2438 = vpack.c.b16 %v2284, %v2283
    %v2439 = vpack.c.b16 %v2286, %v2285
    %v2440 = vpack.c.b16 %v2288, %v2287
    %v2441 = vpack.c.b16 %v2290, %v2289
    %v2442 = vpack.c.b16 %v2292, %v2291
    %v2443 = vpack.c.b16 %v2294, %v2293
    %v2444 = vpack.c.b16 %v2296, %v2295
    %v2445 = vpack.c.b16 %v2298, %v2297
    %v2446 = vpack.c.b16 %v2300, %v2299
    %v2447 = vpack.c.b16 %v2302, %v2301
    %v2448 = vpack.c.b16 %v2304, %v2303
    %v2449 = vpack.c.b16 %v2306, %v2305
    %v2450 = vpack.c.b16 %v2308, %v2307
    %v2451 = vpack.c.b16 %v2310, %v2309
    %v2452 = vpack.c.b16 %v2312, %v2311
    %v2453 = vpack.c.b16 %v2314, %v2313
    %v2454 = vpack.c.b16 %v2316, %v2315
    %v2455 = vpack.c.b16 %v2318, %v2317
    %v2456 = vpack.c.b16 %v2320, %v2319
    %v2457 = vpack.c.b16 %v2322, %v2321
    %v2458 = vpack.c.b16 %v2324, %v2323
    %v2459 = vpack.c.b16 %v2326, %v2325
    %v2460 = vpack.c.b16 %v2328, %v2327
    %v2461 = vpack.c.b16 %v2330, %v2329
    %v2462 = vpack.c.b16 %v2332, %v2331
    %v2463 = vpack.c.b16 %v2334, %v2333
    %v2464 = vpack.c.b16 %v2336, %v2335
    %2593 = vmatprep.subr.bf16.mxu0 0
    %2594 = vmatpush1.bf16.msra.mxu0 %v2337
    %2595 = vmatprep.subr.bf16.mxu0 0
    %2596 = vmatpush1.bf16.msra.mxu0 %v2338
    %2597 = vmatprep.subr.bf16.mxu0 0
    %2598 = vmatpush1.bf16.msra.mxu0 %v2339
    %2599 = vmatprep.subr.bf16.mxu0 0
    %2600 = vmatpush1.bf16.msra.mxu0 %v2340
    %2601 = vmatprep.subr.bf16.mxu0 0
    %2602 = vmatpush1.bf16.msra.mxu0 %v2341
    %2603 = vmatprep.subr.bf16.mxu0 0
    %2604 = vmatpush1.bf16.msra.mxu0 %v2342
    %2605 = vmatprep.subr.bf16.mxu0 0
    %2606 = vmatpush1.bf16.msra.mxu0 %v2343
    %2607 = vmatprep.subr.bf16.mxu0 0
    %2608 = vmatpush1.bf16.msra.mxu0 %v2344
    %2609 = vmatprep.subr.bf16.mxu0 0
    %2610 = vmatpush1.bf16.msra.mxu0 %v2345
    %2611 = vmatprep.subr.bf16.mxu0 0
    %2612 = vmatpush1.bf16.msra.mxu0 %v2346
    %2613 = vmatprep.subr.bf16.mxu0 0
    %2614 = vmatpush1.bf16.msra.mxu0 %v2347
    %2615 = vmatprep.subr.bf16.mxu0 0
    %2616 = vmatpush1.bf16.msra.mxu0 %v2348
    %2617 = vmatprep.subr.bf16.mxu0 0
    %2618 = vmatpush1.bf16.msra.mxu0 %v2349
    %2619 = vmatprep.subr.bf16.mxu0 0
    %2620 = vmatpush1.bf16.msra.mxu0 %v2350
    %2621 = vmatprep.subr.bf16.mxu0 0
    %2622 = vmatpush1.bf16.msra.mxu0 %v2351
    %2623 = vmatprep.subr.bf16.mxu0 0
    %2624 = vmatpush1.bf16.msra.mxu0 %v2352
    %2625 = vmatprep.mubr.bf16.mxu0 %v1547
    %2626 = vmatmul.mubr.bf16.gmra.mrb[0].mxu0 %v1546
    %v2627 = vpop.f32.mrb[0].mxu0
    %v2628 = vadd.f32 %v1823, %v2627
    %v2629 = vpop.f32.mrb[0].mxu0
    %v2630 = vpop.f32.mrb[0].mxu0
    %v2631 = vpop.f32.mrb[0].mxu0
    %2632 = vdwg.mxu0
    %2633 = vmatprep.subr.bf16.mxu0 0
    %2634 = vmatpush1.bf16.msra.mxu0 %v2353
    %2635 = vmatprep.subr.bf16.mxu0 0
    %2636 = vmatpush1.bf16.msra.mxu0 %v2354
    %2637 = vmatprep.subr.bf16.mxu0 0
    %2638 = vmatpush1.bf16.msra.mxu0 %v2355
    %2639 = vmatprep.subr.bf16.mxu0 0
    %2640 = vmatpush1.bf16.msra.mxu0 %v2356
    %2641 = vmatprep.subr.bf16.mxu0 0
    %2642 = vmatpush1.bf16.msra.mxu0 %v2357
    %2643 = vmatprep.subr.bf16.mxu0 0
    %2644 = vmatpush1.bf16.msra.mxu0 %v2358
    %2645 = vmatprep.subr.bf16.mxu0 0
    %2646 = vmatpush1.bf16.msra.mxu0 %v2359
    %2647 = vmatprep.subr.bf16.mxu0 0
    %2648 = vmatpush1.bf16.msra.mxu0 %v2360
    %2649 = vmatprep.subr.bf16.mxu0 0
    %2650 = vmatpush1.bf16.msra.mxu0 %v2361
    %2651 = vmatprep.subr.bf16.mxu0 0
    %2652 = vmatpush1.bf16.msra.mxu0 %v2362
    %2653 = vmatprep.subr.bf16.mxu0 0
    %2654 = vmatpush1.bf16.msra.mxu0 %v2363
    %2655 = vmatprep.subr.bf16.mxu0 0
    %2656 = vmatpush1.bf16.msra.mxu0 %v2364
    %2657 = vmatprep.subr.bf16.mxu0 0
    %2658 = vmatpush1.bf16.msra.mxu0 %v2365
    %2659 = vmatprep.subr.bf16.mxu0 0
    %2660 = vmatpush1.bf16.msra.mxu0 %v2366
    %2661 = vmatprep.subr.bf16.mxu0 0
    %2662 = vmatpush1.bf16.msra.mxu0 %v2367
    %2663 = vmatprep.subr.bf16.mxu0 0
    %2664 = vmatpush1.bf16.msra.mxu0 %v2368
    %2665 = vmatprep.mubr.bf16.mxu0 %v1549
    %2666 = vmatmul.mubr.bf16.gmra.mrb[0].mxu0 %v1548
    %v2667 = vpop.f32.mrb[0].mxu0
    %v2668 = vadd.f32 %v2628, %v2667
    %v2669 = vpop.f32.mrb[0].mxu0
    %v2670 = vpop.f32.mrb[0].mxu0
    %v2671 = vpop.f32.mrb[0].mxu0
    %2672 = vdwg.mxu0
    %2673 = vmatprep.subr.bf16.mxu0 0
    %2674 = vmatpush1.bf16.msra.mxu0 %v2369
    %2675 = vmatprep.subr.bf16.mxu0 0
    %2676 = vmatpush1.bf16.msra.mxu0 %v2370
    %2677 = vmatprep.subr.bf16.mxu0 0
    %2678 = vmatpush1.bf16.msra.mxu0 %v2371
    %2679 = vmatprep.subr.bf16.mxu0 0
    %2680 = vmatpush1.bf16.msra.mxu0 %v2372
    %2681 = vmatprep.subr.bf16.mxu0 0
    %2682 = vmatpush1.bf16.msra.mxu0 %v2373
    %2683 = vmatprep.subr.bf16.mxu0 0
    %2684 = vmatpush1.bf16.msra.mxu0 %v2374
    %2685 = vmatprep.subr.bf16.mxu0 0
    %2686 = vmatpush1.bf16.msra.mxu0 %v2375
    %2687 = vmatprep.subr.bf16.mxu0 0
    %2688 = vmatpush1.bf16.msra.mxu0 %v2376
    %2689 = vmatprep.subr.bf16.mxu0 0
    %2690 = vmatpush1.bf16.msra.mxu0 %v2377
    %2691 = vmatprep.subr.bf16.mxu0 0
    %2692 = vmatpush1.bf16.msra.mxu0 %v2378
    %2693 = vmatprep.subr.bf16.mxu0 0
    %2694 = vmatpush1.bf16.msra.mxu0 %v2379
    %2695 = vmatprep.subr.bf16.mxu0 0
    %2696 = vmatpush1.bf16.msra.mxu0 %v2380
    %2697 = vmatprep.subr.bf16.mxu0 0
    %2698 = vmatpush1.bf16.msra.mxu0 %v2381
    %2699 = vmatprep.subr.bf16.mxu0 0
    %2700 = vmatpush1.bf16.msra.mxu0 %v2382
    %2701 = vmatprep.subr.bf16.mxu0 0
    %2702 = vmatpush1.bf16.msra.mxu0 %v2383
    %2703 = vmatprep.subr.bf16.mxu0 0
    %2704 = vmatpush1.bf16.msra.mxu0 %v2384
    %2705 = vmatprep.mubr.bf16.mxu0 %v1551
    %2706 = vmatmul.mubr.bf16.gmra.mrb[0].mxu0 %v1550
    %v2707 = vpop.f32.mrb[0].mxu0
    %v2708 = vadd.f32 %v2668, %v2707
    %v2709 = vpop.f32.mrb[0].mxu0
    %v2710 = vpop.f32.mrb[0].mxu0
    %v2711 = vpop.f32.mrb[0].mxu0
    %2712 = vdwg.mxu0
    %2713 = vmatprep.subr.bf16.mxu0 0
    %2714 = vmatpush1.bf16.msra.mxu0 %v2385
    %2715 = vmatprep.subr.bf16.mxu0 0
    %2716 = vmatpush1.bf16.msra.mxu0 %v2386
    %2717 = vmatprep.subr.bf16.mxu0 0
    %2718 = vmatpush1.bf16.msra.mxu0 %v2387
    %2719 = vmatprep.subr.bf16.mxu0 0
    %2720 = vmatpush1.bf16.msra.mxu0 %v2388
    %2721 = vmatprep.subr.bf16.mxu0 0
    %2722 = vmatpush1.bf16.msra.mxu0 %v2389
    %2723 = vmatprep.subr.bf16.mxu0 0
    %2724 = vmatpush1.bf16.msra.mxu0 %v2390
    %2725 = vmatprep.subr.bf16.mxu0 0
    %2726 = vmatpush1.bf16.msra.mxu0 %v2391
    %2727 = vmatprep.subr.bf16.mxu0 0
    %2728 = vmatpush1.bf16.msra.mxu0 %v2392
    %2729 = vmatprep.subr.bf16.mxu0 0
    %2730 = vmatpush1.bf16.msra.mxu0 %v2393
    %2731 = vmatprep.subr.bf16.mxu0 0
    %2732 = vmatpush1.bf16.msra.mxu0 %v2394
    %2733 = vmatprep.subr.bf16.mxu0 0
    %2734 = vmatpush1.bf16.msra.mxu0 %v2395
    %2735 = vmatprep.subr.bf16.mxu0 0
    %2736 = vmatpush1.bf16.msra.mxu0 %v2396
    %2737 = vmatprep.subr.bf16.mxu0 0
    %2738 = vmatpush1.bf16.msra.mxu0 %v2397
    %2739 = vmatprep.subr.bf16.mxu0 0
    %2740 = vmatpush1.bf16.msra.mxu0 %v2398
    %2741 = vmatprep.subr.bf16.mxu0 0
    %2742 = vmatpush1.bf16.msra.mxu0 %v2399
    %2743 = vmatprep.subr.bf16.mxu0 0
    %2744 = vmatpush1.bf16.msra.mxu0 %v2400
    %2745 = vmatprep.mubr.bf16.mxu0 %v1553
    %2746 = vmatmul.mubr.bf16.gmra.mrb[0].mxu0 %v1552
    %v2747 = vpop.f32.mrb[0].mxu0
    %v2748 = vadd.f32 %v2708, %v2747
    %v2749 = vpop.f32.mrb[0].mxu0
    %v2750 = vpop.f32.mrb[0].mxu0
    %v2751 = vpop.f32.mrb[0].mxu0
    %2752 = vdwg.mxu0
    %2753 = vmatprep.subr.bf16.mxu0 0
    %2754 = vmatpush1.bf16.msra.mxu0 %v2401
    %2755 = vmatprep.subr.bf16.mxu0 0
    %2756 = vmatpush1.bf16.msra.mxu0 %v2402
    %2757 = vmatprep.subr.bf16.mxu0 0
    %2758 = vmatpush1.bf16.msra.mxu0 %v2403
    %2759 = vmatprep.subr.bf16.mxu0 0
    %2760 = vmatpush1.bf16.msra.mxu0 %v2404
    %2761 = vmatprep.subr.bf16.mxu0 0
    %2762 = vmatpush1.bf16.msra.mxu0 %v2405
    %2763 = vmatprep.subr.bf16.mxu0 0
    %2764 = vmatpush1.bf16.msra.mxu0 %v2406
    %2765 = vmatprep.subr.bf16.mxu0 0
    %2766 = vmatpush1.bf16.msra.mxu0 %v2407
    %2767 = vmatprep.subr.bf16.mxu0 0
    %2768 = vmatpush1.bf16.msra.mxu0 %v2408
    %2769 = vmatprep.subr.bf16.mxu0 0
    %2770 = vmatpush1.bf16.msra.mxu0 %v2409
    %2771 = vmatprep.subr.bf16.mxu0 0
    %2772 = vmatpush1.bf16.msra.mxu0 %v2410
    %2773 = vmatprep.subr.bf16.mxu0 0
    %2774 = vmatpush1.bf16.msra.mxu0 %v2411
    %2775 = vmatprep.subr.bf16.mxu0 0
    %2776 = vmatpush1.bf16.msra.mxu0 %v2412
    %2777 = vmatprep.subr.bf16.mxu0 0
    %2778 = vmatpush1.bf16.msra.mxu0 %v2413
    %2779 = vmatprep.subr.bf16.mxu0 0
    %2780 = vmatpush1.bf16.msra.mxu0 %v2414
    %2781 = vmatprep.subr.bf16.mxu0 0
    %2782 = vmatpush1.bf16.msra.mxu0 %v2415
    %2783 = vmatprep.subr.bf16.mxu0 0
    %2784 = vmatpush1.bf16.msra.mxu0 %v2416
    %2785 = vmatprep.mubr.bf16.mxu0 %v1555
    %2786 = vmatmul.mubr.bf16.gmra.mrb[0].mxu0 %v1554
    %v2787 = vpop.f32.mrb[0].mxu0
    %v2788 = vadd.f32 %v2748, %v2787
    %v2789 = vpop.f32.mrb[0].mxu0
    %v2790 = vpop.f32.mrb[0].mxu0
    %v2791 = vpop.f32.mrb[0].mxu0
    %2792 = vdwg.mxu0
    %2793 = vmatprep.subr.bf16.mxu0 0
    %2794 = vmatpush1.bf16.msra.mxu0 %v2417
    %2795 = vmatprep.subr.bf16.mxu0 0
    %2796 = vmatpush1.bf16.msra.mxu0 %v2418
    %2797 = vmatprep.subr.bf16.mxu0 0
    %2798 = vmatpush1.bf16.msra.mxu0 %v2419
    %2799 = vmatprep.subr.bf16.mxu0 0
    %2800 = vmatpush1.bf16.msra.mxu0 %v2420
    %2801 = vmatprep.subr.bf16.mxu0 0
    %2802 = vmatpush1.bf16.msra.mxu0 %v2421
    %2803 = vmatprep.subr.bf16.mxu0 0
    %2804 = vmatpush1.bf16.msra.mxu0 %v2422
    %2805 = vmatprep.subr.bf16.mxu0 0
    %2806 = vmatpush1.bf16.msra.mxu0 %v2423
    %2807 = vmatprep.subr.bf16.mxu0 0
    %2808 = vmatpush1.bf16.msra.mxu0 %v2424
    %2809 = vmatprep.subr.bf16.mxu0 0
    %2810 = vmatpush1.bf16.msra.mxu0 %v2425
    %2811 = vmatprep.subr.bf16.mxu0 0
    %2812 = vmatpush1.bf16.msra.mxu0 %v2426
    %2813 = vmatprep.subr.bf16.mxu0 0
    %2814 = vmatpush1.bf16.msra.mxu0 %v2427
    %2815 = vmatprep.subr.bf16.mxu0 0
    %2816 = vmatpush1.bf16.msra.mxu0 %v2428
    %2817 = vmatprep.subr.bf16.mxu0 0
    %2818 = vmatpush1.bf16.msra.mxu0 %v2429
    %2819 = vmatprep.subr.bf16.mxu0 0
    %2820 = vmatpush1.bf16.msra.mxu0 %v2430
    %2821 = vmatprep.subr.bf16.mxu0 0
    %2822 = vmatpush1.bf16.msra.mxu0 %v2431
    %2823 = vmatprep.subr.bf16.mxu0 0
    %2824 = vmatpush1.bf16.msra.mxu0 %v2432
    %2825 = vmatprep.mubr.bf16.mxu0 %v1557
    %2826 = vmatmul.mubr.bf16.gmra.mrb[0].mxu0 %v1556
    %v2827 = vpop.f32.mrb[0].mxu0
    %v2828 = vadd.f32 %v2788, %v2827
    %v2829 = vpop.f32.mrb[0].mxu0
    %v2830 = vpop.f32.mrb[0].mxu0
    %v2831 = vpop.f32.mrb[0].mxu0
    %2832 = vdwg.mxu0
    %2833 = vmatprep.subr.bf16.mxu0 0
    %2834 = vmatpush1.bf16.msra.mxu0 %v2433
    %2835 = vmatprep.subr.bf16.mxu0 0
    %2836 = vmatpush1.bf16.msra.mxu0 %v2434
    %2837 = vmatprep.subr.bf16.mxu0 0
    %2838 = vmatpush1.bf16.msra.mxu0 %v2435
    %2839 = vmatprep.subr.bf16.mxu0 0
    %2840 = vmatpush1.bf16.msra.mxu0 %v2436
    %2841 = vmatprep.subr.bf16.mxu0 0
    %2842 = vmatpush1.bf16.msra.mxu0 %v2437
    %2843 = vmatprep.subr.bf16.mxu0 0
    %2844 = vmatpush1.bf16.msra.mxu0 %v2438
    %2845 = vmatprep.subr.bf16.mxu0 0
    %2846 = vmatpush1.bf16.msra.mxu0 %v2439
    %2847 = vmatprep.subr.bf16.mxu0 0
    %2848 = vmatpush1.bf16.msra.mxu0 %v2440
    %2849 = vmatprep.subr.bf16.mxu0 0
    %2850 = vmatpush1.bf16.msra.mxu0 %v2441
    %2851 = vmatprep.subr.bf16.mxu0 0
    %2852 = vmatpush1.bf16.msra.mxu0 %v2442
    %2853 = vmatprep.subr.bf16.mxu0 0
    %2854 = vmatpush1.bf16.msra.mxu0 %v2443
    %2855 = vmatprep.subr.bf16.mxu0 0
    %2856 = vmatpush1.bf16.msra.mxu0 %v2444
    %2857 = vmatprep.subr.bf16.mxu0 0
    %2858 = vmatpush1.bf16.msra.mxu0 %v2445
    %2859 = vmatprep.subr.bf16.mxu0 0
    %2860 = vmatpush1.bf16.msra.mxu0 %v2446
    %2861 = vmatprep.subr.bf16.mxu0 0
    %2862 = vmatpush1.bf16.msra.mxu0 %v2447
    %2863 = vmatprep.subr.bf16.mxu0 0
    %2864 = vmatpush1.bf16.msra.mxu0 %v2448
    %2865 = vmatprep.mubr.bf16.mxu0 %v1559
    %2866 = vmatmul.mubr.bf16.gmra.mrb[0].mxu0 %v1558
    %v2867 = vpop.f32.mrb[0].mxu0
    %v2868 = vadd.f32 %v2828, %v2867
    %v2869 = vpop.f32.mrb[0].mxu0
    %v2870 = vpop.f32.mrb[0].mxu0
    %v2871 = vpop.f32.mrb[0].mxu0
    %2872 = vdwg.mxu0
    %2873 = vmatprep.subr.bf16.mxu0 0
    %2874 = vmatpush1.bf16.msra.mxu0 %v2449
    %2875 = vmatprep.subr.bf16.mxu0 0
    %2876 = vmatpush1.bf16.msra.mxu0 %v2450
    %2877 = vmatprep.subr.bf16.mxu0 0
    %2878 = vmatpush1.bf16.msra.mxu0 %v2451
    %2879 = vmatprep.subr.bf16.mxu0 0
    %2880 = vmatpush1.bf16.msra.mxu0 %v2452
    %2881 = vmatprep.subr.bf16.mxu0 0
    %2882 = vmatpush1.bf16.msra.mxu0 %v2453
    %2883 = vmatprep.subr.bf16.mxu0 0
    %2884 = vmatpush1.bf16.msra.mxu0 %v2454
    %2885 = vmatprep.subr.bf16.mxu0 0
    %2886 = vmatpush1.bf16.msra.mxu0 %v2455
    %2887 = vmatprep.subr.bf16.mxu0 0
    %2888 = vmatpush1.bf16.msra.mxu0 %v2456
    %2889 = vmatprep.subr.bf16.mxu0 0
    %2890 = vmatpush1.bf16.msra.mxu0 %v2457
    %2891 = vmatprep.subr.bf16.mxu0 0
    %2892 = vmatpush1.bf16.msra.mxu0 %v2458
    %2893 = vmatprep.subr.bf16.mxu0 0
    %2894 = vmatpush1.bf16.msra.mxu0 %v2459
    %2895 = vmatprep.subr.bf16.mxu0 0
    %2896 = vmatpush1.bf16.msra.mxu0 %v2460
    %2897 = vmatprep.subr.bf16.mxu0 0
    %2898 = vmatpush1.bf16.msra.mxu0 %v2461
    %2899 = vmatprep.subr.bf16.mxu0 0
    %2900 = vmatpush1.bf16.msra.mxu0 %v2462
    %2901 = vmatprep.subr.bf16.mxu0 0
    %2902 = vmatpush1.bf16.msra.mxu0 %v2463
    %2903 = vmatprep.subr.bf16.mxu0 0
    %2904 = vmatpush1.bf16.msra.mxu0 %v2464
    %2905 = vmatprep.mubr.bf16.mxu0 %v1561
    %2906 = vmatmul.mubr.bf16.gmra.mrb[0].mxu0 %v1560
    %v2907 = vpop.f32.mrb[0].mxu0
    %v2908 = vadd.f32 %v2868, %v2907
    %v2909 = vpop.f32.mrb[0].mxu0
    %v2910 = vpop.f32.mrb[0].mxu0
    %v2911 = vpop.f32.mrb[0].mxu0
    %2912 = vdwg.mxu0
    %v2914 = vrot.slane %v2908, 1
    %v2915 = vrot.slane %v2908, 2
    %v2916 = vrot.slane %v2908, 3
    %v2917 = vrot.slane %v2908, 4
    %v2918 = vrot.slane %v2908, 5
    %v2919 = vrot.slane %v2908, 6
    %v2920 = vrot.slane %v2908, 7
    %v2929 = vadd.f32 %v943, %v2914
    %v2930 = vadd.f32 %v944, %v2915
    %v2931 = vadd.f32 %v945, %v2916
    %v2932 = vadd.f32 %v946, %v2917
    %v2933 = vadd.f32 %v947, %v2918
    %v2934 = vadd.f32 %v948, %v2919
    %v2935 = vadd.f32 %v949, %v2920
    %v2936 = vadd.f32 %v950, %v2908
    %v2937 = vld [vmem:[%s13] sm:$0x1]
    %v2938 = vld [vmem:[%s14] sm:$0x1]
    %v2947 = vrot.slane %v2930, 7
    %v2948 = vrot.slane %v2931, 6
    %v2949 = vsel %vm681, %v2948, %v2947
    %v2950 = vrot.slane %v2932, 5
    %v2951 = vsel %vm683, %v2950, %v2949
    %v2952 = vrot.slane %v2933, 4
    %v2953 = vsel %vm685, %v2952, %v2951
    %v2954 = vrot.slane %v2934, 3
    %v2955 = vsel %vm687, %v2954, %v2953
    %v2956 = vrot.slane %v2935, 2
    %v2957 = vsel %vm689, %v2956, %v2955
    %v2958 = vrot.slane %v2936, 1
    %v2959 = vsel %vm691, %v2958, %v2957
    %v2962 = vsel %vm819, %v2929, 0.0
    %2963 = vadd.xlane.f32.xlu0 %v2962
    %v2964 = vpop.xlane.xlu0 %2963
    %v2965 = vsel %vm823, %v2959, 0.0
    %2966 = vadd.xlane.f32.xlu0 %v2965
    %v2967 = vpop.xlane.xlu0 %2966
    %v2968 = vmul.f32 %v2964, %v827
    %v2969 = vmul.f32 %v2967, %v827
    %v2972 = vrot.slane %v2969, 1
    %v2973 = vrot.slane %v2969, 2
    %v2974 = vrot.slane %v2969, 3
    %v2975 = vrot.slane %v2969, 4
    %v2976 = vrot.slane %v2969, 5
    %v2977 = vrot.slane %v2969, 6
    %v2978 = vrot.slane %v2969, 7
    %v2987 = vsub.f32 %v2929, %v2968
    %v2988 = vsub.f32 %v2930, %v2972
    %v2989 = vsub.f32 %v2931, %v2973
    %v2990 = vsub.f32 %v2932, %v2974
    %v2991 = vsub.f32 %v2933, %v2975
    %v2992 = vsub.f32 %v2934, %v2976
    %v2993 = vsub.f32 %v2935, %v2977
    %v2994 = vsub.f32 %v2936, %v2978
    %v2995 = vmul.f32 %v2987, %v2987
    %v2996 = vmul.f32 %v2988, %v2988
    %v2997 = vmul.f32 %v2989, %v2989
    %v2998 = vmul.f32 %v2990, %v2990
    %v2999 = vmul.f32 %v2991, %v2991
    %v3000 = vmul.f32 %v2992, %v2992
    %v3001 = vmul.f32 %v2993, %v2993
    %v3002 = vmul.f32 %v2994, %v2994
    %v3011 = vrot.slane %v2996, 7
    %v3012 = vrot.slane %v2997, 6
    %v3013 = vsel %vm681, %v3012, %v3011
    %v3014 = vrot.slane %v2998, 5
    %v3015 = vsel %vm683, %v3014, %v3013
    %v3016 = vrot.slane %v2999, 4
    %v3017 = vsel %vm685, %v3016, %v3015
    %v3018 = vrot.slane %v3000, 3
    %v3019 = vsel %vm687, %v3018, %v3017
    %v3020 = vrot.slane %v3001, 2
    %v3021 = vsel %vm689, %v3020, %v3019
    %v3022 = vrot.slane %v3002, 1
    %v3023 = vsel %vm691, %v3022, %v3021
    %v3026 = vsel %vm819, %v2995, 0.0
    %3027 = vadd.xlane.f32.xlu0 %v3026
    %v3028 = vpop.xlane.xlu0 %3027
    %v3029 = vsel %vm823, %v3023, 0.0
    %3030 = vadd.xlane.f32.xlu0 %v3029
    %v3031 = vpop.xlane.xlu0 %3030
    %v3032 = vmul.f32 %v3028, %v827
    %v3033 = vmul.f32 %v3031, %v827
    %v3034 = vadd.f32 %v3032, 1e-05
    %v3035 = vadd.f32 %v3033, 1e-05
    %v3036 = vrsqrt.pop %v3034
    %v3037 = vrsqrt.pop %v3035
    %v3040 = vrot.slane %v3037, 1
    %v3041 = vrot.slane %v3037, 2
    %v3042 = vrot.slane %v3037, 3
    %v3043 = vrot.slane %v3037, 4
    %v3044 = vrot.slane %v3037, 5
    %v3045 = vrot.slane %v3037, 6
    %v3046 = vrot.slane %v3037, 7
    %v3055 = vmul.f32 %v2987, %v3036
    %v3056 = vmul.f32 %v2988, %v3040
    %v3057 = vmul.f32 %v2989, %v3041
    %v3058 = vmul.f32 %v2990, %v3042
    %v3059 = vmul.f32 %v2991, %v3043
    %v3060 = vmul.f32 %v2992, %v3044
    %v3061 = vmul.f32 %v2993, %v3045
    %v3062 = vmul.f32 %v2994, %v3046
    %v3064 = vlaneseq
    %v3065 = vshrl.u32 %v3064, 7
    %v3066 = vsub.s32 0, %v3065
    %v3067 = vrot.slane %v2937, %v3066
    %v3069 = vmul.f32 %v3055, %v3067
    %v3070 = vmul.f32 %v3056, %v3067
    %v3071 = vmul.f32 %v3057, %v3067
    %v3072 = vmul.f32 %v3058, %v3067
    %v3073 = vmul.f32 %v3059, %v3067
    %v3074 = vmul.f32 %v3060, %v3067
    %v3075 = vmul.f32 %v3061, %v3067
    %v3076 = vmul.f32 %v3062, %v3067
    %v3078 = vlaneseq
    %v3079 = vshrl.u32 %v3078, 7
    %v3080 = vsub.s32 0, %v3079
    %v3081 = vrot.slane %v2938, %v3080
    %v3083 = vadd.f32 %v3069, %v3081
    %v3084 = vadd.f32 %v3070, %v3081
    %v3085 = vadd.f32 %v3071, %v3081
    %v3086 = vadd.f32 %v3072, %v3081
    %v3087 = vadd.f32 %v3073, %v3081
    %v3088 = vadd.f32 %v3074, %v3081
    %v3089 = vadd.f32 %v3075, %v3081
    %v3090 = vadd.f32 %v3076, %v3081
    %v3099 = vrot.slane %v3083, 7
    %v3100 = vrot.slane %v3084, 6
    %v3101 = vsel %vm681, %v3100, %v3099
    %v3102 = vrot.slane %v3085, 5
    %v3103 = vsel %vm683, %v3102, %v3101
    %v3104 = vrot.slane %v3086, 4
    %v3105 = vsel %vm685, %v3104, %v3103
    %v3106 = vrot.slane %v3087, 3
    %v3107 = vsel %vm687, %v3106, %v3105
    %v3108 = vrot.slane %v3088, 2
    %v3109 = vsel %vm689, %v3108, %v3107
    %v3110 = vrot.slane %v3089, 1
    %v3111 = vsel %vm691, %v3110, %v3109
    %v3112 = vsel %vm693, %v3090, %v3111
    %3114 = vxpose.xlu0.b32.start [1/16] %v3112, 128
    %3115 = vxpose.xlu0.b32.cont [2/16] 0.0, 128
    %3116 = vxpose.xlu0.b32.cont [3/16] 0.0, 128
    %3117 = vxpose.xlu0.b32.cont [4/16] 0.0, 128
    %3118 = vxpose.xlu0.b32.cont [5/16] 0.0, 128
    %3119 = vxpose.xlu0.b32.cont [6/16] 0.0, 128
    %3120 = vxpose.xlu0.b32.cont [7/16] 0.0, 128
    %3121 = vxpose.xlu0.b32.cont [8/16] 0.0, 128
    %3122 = vxpose.xlu0.b32.cont [9/16] 0.0, 128
    %3123 = vxpose.xlu0.b32.cont [10/16] 0.0, 128
    %3124 = vxpose.xlu0.b32.cont [11/16] 0.0, 128
    %3125 = vxpose.xlu0.b32.cont [12/16] 0.0, 128
    %3126 = vxpose.xlu0.b32.cont [13/16] 0.0, 128
    %3127 = vxpose.xlu0.b32.cont [14/16] 0.0, 128
    %3128 = vxpose.xlu0.b32.cont [15/16] 0.0, 128
    %3129 = vxpose.xlu0.b32.end [16/16] 0.0, 128
    %v3130 = vpop.trf.xlu0
    %v3131 = vpop.trf.xlu0
    %v3132 = vpop.trf.xlu0
    %v3133 = vpop.trf.xlu0
    %v3134 = vpop.trf.xlu0
    %v3135 = vpop.trf.xlu0
    %v3136 = vpop.trf.xlu0
    %v3137 = vpop.trf.xlu0
    %v3138 = vpop.trf.xlu0
    %v3139 = vpop.trf.xlu0
    %v3140 = vpop.trf.xlu0
    %v3141 = vpop.trf.xlu0
    %v3142 = vpop.trf.xlu0
    %v3143 = vpop.trf.xlu0
    %v3144 = vpop.trf.xlu0
    %v3145 = vpop.trf.xlu0
    %v3146 = vld [vmem:[%s15] sm:$0xf]
    %3148 = vset.pattern.permute.xlu0 0
    %3149 = vperm.xlu0 %3148, %v3146
    %v3150 = vpop.permute.xlu0 %3149
    %v3152 = vmul.f32 %v3130, %v3150
    %vm3153 = vcmask 60416
    %v3154 = vsel %vm3153, %v3152, 0.0
    %v3155 = vrot.slane %v3154, 4
    %v3156 = vadd.f32 %v3154, %v3155
    %v3157 = vrot.slane %v3156, 2
    %v3158 = vadd.f32 %v3156, %v3157
    %v3159 = vrot.slane %v3158, 1
    %v3160 = vadd.f32 %v3158, %v3159
    %v3161 = vld [vmem:[#allocation2] sm:$0x1]
    %3163 = vset.pattern.permute.xlu0 0
    %3164 = vperm.xlu0 %3163, %v3161
    %v3165 = vpop.permute.xlu0 %3164
    %v3167 = vlaneseq
    %v3168 = vshrl.u32 %v3167, 7
    %v3169 = vsub.s32 0, %v3168
    %v3170 = vrot.slane %v3165, %v3169
    %v3171 = vadd.f32 %v3160, %v3170
    %vm3172 = vcmask 57344
    %3173 = vst.msk [vmem:[#allocation3] sm:$0x1] %vm3172, %v3171
    // Predicated region
    $region70: #{tpu_custom_call.1} parent=1 // pred_check
      _
    $region71: #{tpu_custom_call.1} parent=1 // pred_check_branch
      %3175 = sbr.rel (0) target = $region73
    $region72: #{tpu_custom_call.1} parent=1 // pred_region
      %s3177 = ssub.s32 16, 16
      %3178 = vsyncadd [#allocation4], %s3177
      %s3180 = sshll.u32 [#allocation3], 4
      %s3181 = int_to_ptr.vmem [resolvable:$true] %s3180
      %3183 = dma.vmem_to_hbm [thread:$0]  %s3181, 16, %s17, [#allocation4]
    $region73: #{tpu_custom_call.1} parent=1 // pred_fallthru
      _
    // Predicated region
    $region74: #{tpu_custom_call.1} parent=1 // pred_check
      _
    $region75: #{tpu_custom_call.1} parent=1 // pred_check_branch
      %3185 = sbr.rel (0) target = $region77
    $region76: #{tpu_custom_call.1} parent=1 // pred_region
      %3186 = dma.done [#allocation4], 16
    $region77: #{tpu_custom_call.1} parent=1 // pred_fallthru
      _
    %3187 = vsyncpa [#allocation4], 1

</llo_original>
